<compile_context>
chip_gen: v6e
topology: v6e:2x2x1
jax: 0.10.0
libtpu: 0.0.40
codegen_flags: <defaults>
</compile_context>

<pallas_src>
import jax
import jax.numpy as jnp
from jax.experimental import pallas as pl
from jax.experimental.pallas import tpu as pltpu


# ----------------------------------------------------------------------------
# Fused kernel: m0 (all frames at once) -> m1 -> unsqueeze(0)+m2 -> score.
#   x_ref    : (C, T*HW)   all frames, pixels lane-dense, frame t at lanes [t*HW,(t+1)*HW)
#   w0t_ref  : (D, C)      pointwise conv weight (transposed orientation)
#   b0_ref   : (D, 1)
#   pool_ref : (T*HW, T)   block-diagonal per-frame spatial-mean matrix (entries 1/HW)
#   w1t_ref  : (H1, D)     m1 linear weight (transposed orientation)
#   b1_ref   : (H1, 1)
#   w2_ref   : (H1, 1)     m2 final projection weight (used on the VPU)
#   b2_ref   : (1,)        scalar bias in SMEM
#   o_ref    : (1, 1)      quality score
# ----------------------------------------------------------------------------
def mix_kernel(x_ref, w0t_ref, b0_ref, pool_ref, w1t_ref, b1_ref, w2_ref,
               b2_ref, o_ref):
    # ---- m0: pointwise conv for ALL frames in one MXU call, bias + ReLU once.
    y = jnp.dot(w0t_ref[...], x_ref[...],
                preferred_element_type=jnp.float32)            # (D, T*HW)
    y = jnp.maximum(y + b0_ref[...], 0.0)                      # ReLU, single broadcast

    # ---- per-frame spatial mean + "concat over frames" as one chained matmul.
    # pool is block-diagonal with 1/HW, so this is mean(relu(conv)) per frame,
    # laid out as (D, T) == torch.cat over frames (dim=0), transposed.
    feats = jnp.dot(y, pool_ref[...],
                    preferred_element_type=jnp.float32)        # (D, T)

    # ---- m1: Linear + GELU, applied to all frames with one MXU matmul.
    h = jnp.dot(w1t_ref[...], feats,
                preferred_element_type=jnp.float32)            # (H1, T)
    # TODO(synk): torch.nn.GELU defaults to the exact erf form; we use the tanh
    # approximation (EUP-friendly) since m1 is a synthetic stand-in anyway.
    h = jax.nn.gelu(h + b1_ref[...], approximate=True)

    # ---- unsqueeze(0) is layout glue; m2 = temporal mean pool + Linear(H1 -> 1).
    pooled = jnp.mean(h, axis=1, keepdims=True)                # (H1, 1)
    # Final projection on the VPU (elementwise mul) + sublane reduce; no M=N=1 MXU call.
    score = jnp.sum(pooled * w2_ref[...], axis=0, keepdims=True)   # (1, 1)
    o_ref[...] = score + b2_ref[0]


def mix_forward(frames_nchw, params):
    """frames (T, C, H, W) NCHW -> quality score (1, 1)."""
    T, C, H, W = frames_nchw.shape
    HW = H * W
    # One-time 32 KB layout move: NCHW -> (C, T*HW), frames concatenated on the
    # lane axis at HW(=256)-aligned boundaries. Legitimate layout plumbing.
    x_all = frames_nchw.transpose(1, 0, 2, 3).reshape(C, T * HW).astype(jnp.float32)
    # Compile-time block-diagonal pooling matrix: pool[t*HW + p, t] = 1/HW.
    pool = jnp.repeat(jnp.eye(T, dtype=jnp.float32), HW, axis=0) / float(HW)  # (T*HW, T)

    vmem = pl.BlockSpec(memory_space=pltpu.MemorySpace.VMEM)
    return pl.pallas_call(
        mix_kernel,
        out_shape=jax.ShapeDtypeStruct((1, 1), jnp.float32),
        # No grid: single invocation, no software-pipeline scaffolding.
        in_specs=[
            vmem,   # x_all   (C, T*HW)
            vmem,   # w0t     (D, C)
            vmem,   # b0      (D, 1)
            vmem,   # pool    (T*HW, T)
            vmem,   # w1t     (H1, D)
            vmem,   # b1      (H1, 1)
            vmem,   # w2      (H1, 1)
            pl.BlockSpec(memory_space=pltpu.MemorySpace.SMEM),   # b2 scalar bias
        ],
        # (1,1) VMEM output: masked store on a padded tile, accepted knowingly.
        out_specs=pl.BlockSpec(memory_space=pltpu.MemorySpace.VMEM),
    )(x_all, params["w0t"], params["b0"], pool, params["w1t"], params["b1"],
      params["w2"], params["b2"])


def mix_reference(frames_nchw, params):
    """Pure-JAX reference for the same synthetic m0/m1/m2 stack."""
    T, C, H, W = frames_nchw.shape
    x = frames_nchw.reshape(T, C, H * W).astype(jnp.float32)
    y = jnp.einsum("dc,tch->tdh", params["w0t"], x) + params["b0"][None]   # (T, D, HW)
    feat = jnp.mean(jax.nn.relu(y), axis=2)                                 # (T, D)
    h = feat @ params["w1t"].T + params["b1"][:, 0]                         # (T, H1)
    h = jax.nn.gelu(h, approximate=True)
    pooled = jnp.mean(h, axis=0)                                            # (H1,)
    score = jnp.sum(pooled * params["w2"][:, 0]) + params["b2"][0]
    return score.reshape(1, 1)


def init_params(key, C, D, H1):
    k0, k1, k2 = jax.random.split(key, 3)
    return {
        "w0t": jax.random.normal(k0, (D, C), jnp.float32) * 0.1,   # pointwise conv (C->D)
        "b0": jnp.zeros((D, 1), jnp.float32),
        "w1t": jax.random.normal(k1, (H1, D), jnp.float32) * 0.1,  # Linear(D->H1)
        "b1": jnp.zeros((H1, 1), jnp.float32),
        "w2": jax.random.normal(k2, (H1, 1), jnp.float32) * 0.1,   # Linear(H1->1)
        "b2": jnp.zeros((1,), jnp.float32),
    }


if __name__ == "__main__":
    # TODO(synk): TemporalCrop(input_video_path) is video-file I/O with no Pallas
    # equivalent; we start from the already-cropped frame tensor.
    T, C, H, W = 8, 4, 16, 16   # 8 temporal crops of 4-channel 16x16 frames
    D, H1 = 32, 32

    key = jax.random.PRNGKey(0)
    k_in, k_par = jax.random.split(key)
    frames = jax.random.normal(k_in, (T, C, H, W), jnp.float32)
    params = init_params(k_par, C, D, H1)

    out = mix_forward(frames, params)
    jax.block_until_ready(out)

    assert out.shape == (1, 1) and out.dtype == jnp.float32
    assert bool(jnp.all(jnp.isfinite(out)))
    ref = mix_reference(frames, params)
    assert bool(jnp.allclose(out, ref, atol=5e-3, rtol=5e-2)), (out, ref)
    print("KERNEL_OK")
</pallas_src>

<mosaic_0001>
module attributes {stable_mosaic.version = 11 : i64} {
  func.func @mix_kernel(%arg0: memref<4x2048xf32, #tpu.memory_space<vmem>>, %arg1: memref<32x4xf32, #tpu.memory_space<vmem>>, %arg2: memref<32x1xf32, #tpu.memory_space<vmem>>, %arg3: memref<2048x8xf32, #tpu.memory_space<vmem>>, %arg4: memref<32x32xf32, #tpu.memory_space<vmem>>, %arg5: memref<32x1xf32, #tpu.memory_space<vmem>>, %arg6: memref<32x1xf32, #tpu.memory_space<vmem>>, %arg7: memref<1xf32, #tpu.memory_space<smem>>, %arg8: memref<1x1xf32, #tpu.memory_space<vmem>>) attributes {dimension_semantics = [], scalar_prefetch = 0 : i64, scratch_operands = 0 : i64, tpu.core_type = #tpu.core_type<tc>} {
    %c0 = arith.constant 0 : index
    %c0_0 = arith.constant 0 : index
    %0 = vector.load %arg1[%c0, %c0_0] : memref<32x4xf32, #tpu.memory_space<vmem>>, vector<32x4xf32>
    %c0_1 = arith.constant 0 : index
    %c0_2 = arith.constant 0 : index
    %1 = vector.load %arg0[%c0_1, %c0_2] : memref<4x2048xf32, #tpu.memory_space<vmem>>, vector<4x2048xf32>
    %cst = arith.constant dense<0.000000e+00> : vector<32x2048xf32>
    %2 = tpu.matmul %0, %1, %cst {dimension_numbers = #tpu.dot_dimension_numbers<[1], [0], [0], [1], [0, 0, 1, 1], [], []>} : vector<32x4xf32>, vector<4x2048xf32>, vector<32x2048xf32> -> vector<32x2048xf32>
    %c0_3 = arith.constant 0 : index
    %c0_4 = arith.constant 0 : index
    %3 = vector.load %arg2[%c0_3, %c0_4] : memref<32x1xf32, #tpu.memory_space<vmem>>, vector<32x1xf32>
    %4 = vector.broadcast %3 : vector<32x1xf32> to vector<32x2048xf32>
    %5 = arith.addf %2, %4 : vector<32x2048xf32>
    %cst_5 = arith.constant 0.000000e+00 : f32
    %6 = vector.broadcast %cst_5 : f32 to vector<32x2048xf32>
    %7 = arith.maximumf %5, %6 : vector<32x2048xf32>
    %c0_6 = arith.constant 0 : index
    %c0_7 = arith.constant 0 : index
    %8 = vector.load %arg3[%c0_6, %c0_7] : memref<2048x8xf32, #tpu.memory_space<vmem>>, vector<2048x8xf32>
    %cst_8 = arith.constant dense<0.000000e+00> : vector<32x8xf32>
    %9 = tpu.matmul %7, %8, %cst_8 {dimension_numbers = #tpu.dot_dimension_numbers<[1], [0], [0], [1], [0, 0, 1, 1], [], []>} : vector<32x2048xf32>, vector<2048x8xf32>, vector<32x8xf32> -> vector<32x8xf32>
    %c0_9 = arith.constant 0 : index
    %c0_10 = arith.constant 0 : index
    %10 = vector.load %arg4[%c0_9, %c0_10] : memref<32x32xf32, #tpu.memory_space<vmem>>, vector<32x32xf32>
    %cst_11 = arith.constant dense<0.000000e+00> : vector<32x8xf32>
    %11 = tpu.matmul %10, %9, %cst_11 {dimension_numbers = #tpu.dot_dimension_numbers<[1], [0], [0], [1], [0, 0, 1, 1], [], []>} : vector<32x32xf32>, vector<32x8xf32>, vector<32x8xf32> -> vector<32x8xf32>
    %c0_12 = arith.constant 0 : index
    %c0_13 = arith.constant 0 : index
    %12 = vector.load %arg5[%c0_12, %c0_13] : memref<32x1xf32, #tpu.memory_space<vmem>>, vector<32x1xf32>
    %13 = vector.broadcast %12 : vector<32x1xf32> to vector<32x8xf32>
    %14 = arith.addf %11, %13 : vector<32x8xf32>
    %15 = arith.mulf %14, %14 : vector<32x8xf32>
    %16 = arith.mulf %14, %15 : vector<32x8xf32>
    %cst_14 = arith.constant 4.471500e-02 : f32
    %17 = vector.broadcast %cst_14 : f32 to vector<32x8xf32>
    %18 = arith.mulf %17, %16 : vector<32x8xf32>
    %19 = arith.addf %14, %18 : vector<32x8xf32>
    %cst_15 = arith.constant 0.797884583 : f32
    %20 = vector.broadcast %cst_15 : f32 to vector<32x8xf32>
    %21 = arith.mulf %20, %19 : vector<32x8xf32>
    %22 = math.tanh %21 : vector<32x8xf32>
    %cst_16 = arith.constant 1.000000e+00 : f32
    %23 = vector.broadcast %cst_16 : f32 to vector<32x8xf32>
    %24 = arith.addf %23, %22 : vector<32x8xf32>
    %cst_17 = arith.constant 5.000000e-01 : f32
    %25 = vector.broadcast %cst_17 : f32 to vector<32x8xf32>
    %26 = arith.mulf %25, %24 : vector<32x8xf32>
    %27 = arith.mulf %14, %26 : vector<32x8xf32>
    %cst_18 = arith.constant dense<0.000000e+00> : vector<32xf32>
    %28 = vector.multi_reduction <add>, %27, %cst_18 [1] : vector<32x8xf32> to vector<32xf32>
    %29 = vector.shape_cast %28 : vector<32xf32> to vector<32x1xf32>
    %cst_19 = arith.constant 8.000000e+00 : f32
    %30 = vector.broadcast %cst_19 : f32 to vector<32x1xf32>
    %31 = arith.divf %29, %30 : vector<32x1xf32>
    %c0_20 = arith.constant 0 : index
    %c0_21 = arith.constant 0 : index
    %32 = vector.load %arg6[%c0_20, %c0_21] : memref<32x1xf32, #tpu.memory_space<vmem>>, vector<32x1xf32>
    %33 = arith.mulf %31, %32 : vector<32x1xf32>
    %cst_22 = arith.constant dense<0.000000e+00> : vector<1xf32>
    %34 = vector.multi_reduction <add>, %33, %cst_22 [0] : vector<32x1xf32> to vector<1xf32>
    %35 = vector.shape_cast %34 : vector<1xf32> to vector<1x1xf32>
    %c0_23 = arith.constant 0 : index
    %36 = memref.load %arg7[%c0_23] : memref<1xf32, #tpu.memory_space<smem>>
    %37 = vector.broadcast %36 : f32 to vector<1x1xf32>
    %38 = arith.addf %35, %37 : vector<1x1xf32>
    %c0_24 = arith.constant 0 : index
    %c0_25 = arith.constant 0 : index
    %39 = vector.load %arg8[%c0_24, %c0_25] : memref<1x1xf32, #tpu.memory_space<vmem>>, vector<1x1xf32>
    tpu.vector_store %arg8[%c0_24, %c0_25], %38 {strides = array<i32>} : memref<1x1xf32, #tpu.memory_space<vmem>>, vector<1x1xf32>,
    return
  }
}

</mosaic_0001>

<llo_original>
// kernel: tpu_custom_call.1
$region0: #{tpu_custom_call.1}
  #allocation0 [shape = 'u32[]', space=smem, size = 0x4, offset = 0x4, fixed_abs, tag = 'smem constant byte address 0x4 - core index']
  #allocation1 [shape = 'u32[144,128]{1,0:T(1,128)}', space=vmem, size = 0x12000, scoped, tag = 'internal scratch']
  #allocation2 [shape = 'f32[1]{0:T(128)S(6)}', space=smem, size = 0x200, scoped, tag = 'scoped memory for tpu_custom_call.1']
  %s0 = inlined_call_operand.vmem [shape: f32[4,2048], index: 0, kind: input, shape index: {}]
  %s1 = inlined_call_operand.vmem [shape: f32[32,4], index: 1, kind: input, shape index: {}]
  %s2 = inlined_call_operand.vmem [shape: f32[32,1], index: 2, kind: input, shape index: {}]
  %s3 = inlined_call_operand.vmem [shape: f32[2048,8], index: 3, kind: input, shape index: {}]
  %s4 = inlined_call_operand.vmem [shape: f32[32,32], index: 4, kind: input, shape index: {}]
  %s5 = inlined_call_operand.vmem [shape: f32[32,1], index: 5, kind: input, shape index: {}]
  %s6 = inlined_call_operand.vmem [shape: f32[32,1], index: 6, kind: input, shape index: {}]
  %s7 = inlined_call_operand.<no memory space> [shape: f32[1], index: 7, kind: input, shape index: {}]
  %s8 = inlined_call_operand.hbm [shape: f32[1,1], index: 8, kind: output, shape index: {}]
  %s9 = sld [smem:[#allocation0]]
  $region42: #{tpu_custom_call.1} parent=0
    _
  %s11 = ssub.s32 1, %s9
  %s12 = scalar_select 0, %s11, %s9
  %13 = sst [smem:[#allocation2]] %s7
  $region1: #{tpu_custom_call.1} parent=0
    #allocation3 [shape = 'u8[512]{0}', space=vmem, size = 0x400, scoped, tag = 'output window, operand 0, single buffered']
    #allocation4 [shape = 's32[1]{0}', space=sflag, size = 0x4, scoped, tag = 'scoped memory for tpu_custom_call.1']
    %14 = vsyncpa [#allocation4], 0
    // Predicated region
    $region2: #{tpu_custom_call.1} parent=1 // pred_check
      _
    $region3: #{tpu_custom_call.1} parent=1 // pred_check_branch
      %16 = sbr.rel (0) target = $region5
    $region4: #{tpu_custom_call.1} parent=1 // pred_region
      _
    $region5: #{tpu_custom_call.1} parent=1 // pred_fallthru
      _
    // Predicated region
    $region6: #{tpu_custom_call.1} parent=1 // pred_check
      _
    $region7: #{tpu_custom_call.1} parent=1 // pred_check_branch
      %18 = sbr.rel (0) target = $region9
    $region8: #{tpu_custom_call.1} parent=1 // pred_region
      _
    $region9: #{tpu_custom_call.1} parent=1 // pred_fallthru
      _
    // Predicated region
    $region10: #{tpu_custom_call.1} parent=1 // pred_check
      _
    $region11: #{tpu_custom_call.1} parent=1 // pred_check_branch
      %20 = sbr.rel (0) target = $region13
    $region12: #{tpu_custom_call.1} parent=1 // pred_region
      _
    $region13: #{tpu_custom_call.1} parent=1 // pred_fallthru
      _
    // Predicated region
    $region14: #{tpu_custom_call.1} parent=1 // pred_check
      _
    $region15: #{tpu_custom_call.1} parent=1 // pred_check_branch
      %22 = sbr.rel (0) target = $region17
    $region16: #{tpu_custom_call.1} parent=1 // pred_region
      _
    $region17: #{tpu_custom_call.1} parent=1 // pred_fallthru
      _
    // Predicated region
    $region18: #{tpu_custom_call.1} parent=1 // pred_check
      _
    $region19: #{tpu_custom_call.1} parent=1 // pred_check_branch
      %24 = sbr.rel (0) target = $region21
    $region20: #{tpu_custom_call.1} parent=1 // pred_region
      _
    $region21: #{tpu_custom_call.1} parent=1 // pred_fallthru
      _
    // Predicated region
    $region22: #{tpu_custom_call.1} parent=1 // pred_check
      _
    $region23: #{tpu_custom_call.1} parent=1 // pred_check_branch
      %26 = sbr.rel (0) target = $region25
    $region24: #{tpu_custom_call.1} parent=1 // pred_region
      _
    $region25: #{tpu_custom_call.1} parent=1 // pred_fallthru
      _
    // Predicated region
    $region26: #{tpu_custom_call.1} parent=1 // pred_check
      _
    $region27: #{tpu_custom_call.1} parent=1 // pred_check_branch
      %28 = sbr.rel (0) target = $region29
    $region28: #{tpu_custom_call.1} parent=1 // pred_region
      _
    $region29: #{tpu_custom_call.1} parent=1 // pred_fallthru
      _
    // Predicated region
    $region30: #{tpu_custom_call.1} parent=1 // pred_check
      _
    $region31: #{tpu_custom_call.1} parent=1 // pred_check_branch
      %30 = sbr.rel (0) target = $region33
    $region32: #{tpu_custom_call.1} parent=1 // pred_region
      _
    $region33: #{tpu_custom_call.1} parent=1 // pred_fallthru
      _
    %v31 = vld [vmem:[%s1] sm:$0xff]
    %v32 = vld [vmem:[%s1 + $0x8] sm:$0xff]
    %v33 = vld [vmem:[%s1 + $0x10] sm:$0xff]
    %v34 = vld [vmem:[%s1 + $0x18] sm:$0xff]
    %v35 = vld [vmem:[%s0] sm:$0xff]
    %v36 = vld [vmem:[%s0 + $0x8] sm:$0xff]
    %v37 = vld [vmem:[%s0 + $0x10] sm:$0xff]
    %v38 = vld [vmem:[%s0 + $0x18] sm:$0xff]
    %v39 = vld [vmem:[%s0 + $0x20] sm:$0xff]
    %v40 = vld [vmem:[%s0 + $0x28] sm:$0xff]
    %v41 = vld [vmem:[%s0 + $0x30] sm:$0xff]
    %v42 = vld [vmem:[%s0 + $0x38] sm:$0xff]
    %v43 = vld [vmem:[%s2] sm:$0xff]
    %v44 = vld [vmem:[%s2 + $0x8] sm:$0xff]
    %v45 = vld [vmem:[%s2 + $0x10] sm:$0xff]
    %v46 = vld [vmem:[%s2 + $0x18] sm:$0xff]
    %48 = vset.pattern.permute.xlu0 0
    %49 = vperm.xlu0 %48, %v43
    %v50 = vpop.permute.xlu0 %49
    %53 = vset.pattern.permute.xlu0 0
    %54 = vperm.xlu0 %53, %v44
    %v55 = vpop.permute.xlu0 %54
    %58 = vset.pattern.permute.xlu0 0
    %59 = vperm.xlu0 %58, %v45
    %v60 = vpop.permute.xlu0 %59
    %63 = vset.pattern.permute.xlu0 0
    %64 = vperm.xlu0 %63, %v46
    %v65 = vpop.permute.xlu0 %64
    %v75 = vcombine.high %v35, %v35
    %v76 = vcombine.high %v36, %v36
    %v77 = vcombine.high %v37, %v37
    %v78 = vcombine.high %v38, %v38
    %v79 = vcombine.high %v39, %v39
    %v80 = vcombine.high %v40, %v40
    %v81 = vcombine.high %v41, %v41
    %v82 = vcombine.high %v42, %v42
    %vm83 = vcmask 31744
    %v85 = vsel %vm83, %v31, 0
    %v88 = vsel %vm83, %v32, 0
    %v91 = vsel %vm83, %v33, 0
    %v94 = vsel %vm83, %v34, 0
    %vm96 = vcmask 1043456
    %v97 = vsel %vm96, %v35, 0
    %v99 = vsel %vm96, %v75, 0
    %v101 = vsel %vm96, %v36, 0
    %v103 = vsel %vm96, %v76, 0
    %v105 = vsel %vm96, %v37, 0
    %v107 = vsel %vm96, %v77, 0
    %v109 = vsel %vm96, %v38, 0
    %v111 = vsel %vm96, %v78, 0
    %v113 = vsel %vm96, %v39, 0
    %v115 = vsel %vm96, %v79, 0
    %v117 = vsel %vm96, %v40, 0
    %v119 = vsel %vm96, %v80, 0
    %v121 = vsel %vm96, %v41, 0
    %v123 = vsel %vm96, %v81, 0
    %v125 = vsel %vm96, %v42, 0
    %v127 = vsel %vm96, %v82, 0
    %129 = vmatprep.subr.mxu0 0.0
    %130 = vmatpush1.msra.mxu0 0.0
    %131 = vmatprep.subr.mxu0 0.0
    %132 = vmatpush1.msra.mxu0 0.0
    %133 = vmatprep.subr.mxu0 0.0
    %134 = vmatpush1.msra.mxu0 0.0
    %135 = vmatprep.subr.mxu0 0.0
    %136 = vmatpush1.msra.mxu0 0.0
    %137 = vmatprep.subr.mxu0 0.0
    %138 = vmatpush1.msra.mxu0 0.0
    %139 = vmatprep.subr.mxu0 0.0
    %140 = vmatpush1.msra.mxu0 0.0
    %141 = vmatprep.subr.mxu0 0.0
    %142 = vmatpush1.msra.mxu0 0.0
    %143 = vmatprep.subr.mxu0 0.0
    %144 = vmatpush1.msra.mxu0 0.0
    %145 = vmatprep.subr.mxu0 0.0
    %146 = vmatpush1.msra.mxu0 0.0
    %147 = vmatprep.subr.mxu0 0.0
    %148 = vmatpush1.msra.mxu0 0.0
    %149 = vmatprep.subr.mxu0 0.0
    %150 = vmatpush1.msra.mxu0 0.0
    %151 = vmatprep.subr.mxu0 0.0
    %152 = vmatpush1.msra.mxu0 0.0
    %153 = vmatprep.subr.mxu0 0.0
    %154 = vmatpush1.msra.mxu0 0.0
    %155 = vmatprep.subr.mxu0 0.0
    %156 = vmatpush1.msra.mxu0 0.0
    %157 = vmatprep.subr.mxu0 0.0
    %158 = vmatpush1.msra.mxu0 0.0
    %159 = vmatprep.subr.mxu0 %v99
    %160 = vmatpush1.msra.mxu0 %v97
    %161 = vmatprep.subr.mxu0 0.0
    %162 = vmatpush2.msra.mxu0 0.0
    %163 = vmatprep.subr.mxu0 0.0
    %164 = vmatpush2.msra.mxu0 0.0
    %165 = vmatprep.subr.mxu0 0.0
    %166 = vmatpush2.msra.mxu0 0.0
    %167 = vmatprep.subr.mxu0 0.0
    %168 = vmatpush2.msra.mxu0 0.0
    %169 = vmatprep.subr.mxu0 0.0
    %170 = vmatpush2.msra.mxu0 0.0
    %171 = vmatprep.subr.mxu0 0.0
    %172 = vmatpush2.msra.mxu0 0.0
    %173 = vmatprep.subr.mxu0 0.0
    %174 = vmatpush2.msra.mxu0 0.0
    %175 = vmatprep.subr.mxu0 0.0
    %176 = vmatpush2.msra.mxu0 0.0
    %177 = vmatprep.subr.mxu0 0.0
    %178 = vmatpush2.msra.mxu0 0.0
    %179 = vmatprep.subr.mxu0 0.0
    %180 = vmatpush2.msra.mxu0 0.0
    %181 = vmatprep.subr.mxu0 0.0
    %182 = vmatpush2.msra.mxu0 0.0
    %183 = vmatprep.subr.mxu0 0.0
    %184 = vmatpush2.msra.mxu0 0.0
    %185 = vmatprep.subr.mxu0 0.0
    %186 = vmatpush2.msra.mxu0 0.0
    %187 = vmatprep.subr.mxu0 0.0
    %188 = vmatpush2.msra.mxu0 0.0
    %189 = vmatprep.subr.mxu0 0.0
    %190 = vmatpush2.msra.mxu0 0.0
    %191 = vmatprep.subr.mxu0 0.0
    %192 = vmatpush2.msra.mxu0 0.0
    %193 = vmatprep.mubr.f32.mxu0 0.0
    %194 = vmatmul.mubr.f32.gmra.mxu0 %v85
    %v195 = vpop.f32.mrf.mxu0
    %v196 = vadd.f32 %v50, %v195
    %v197 = vpop.f32.mrf.mxu0
    %v198 = vadd.f32 %v50, %v197
    %199 = vmatprep.mubr.f32.mxu0 0.0
    %200 = vmatmul.mubr.f32.gmra.mxu0 %v88
    %v201 = vpop.f32.mrf.mxu0
    %v202 = vadd.f32 %v55, %v201
    %v203 = vpop.f32.mrf.mxu0
    %v204 = vadd.f32 %v55, %v203
    %205 = vmatprep.mubr.f32.mxu0 0.0
    %206 = vmatmul.mubr.f32.gmra.mxu0 %v91
    %v207 = vpop.f32.mrf.mxu0
    %v208 = vadd.f32 %v60, %v207
    %v209 = vpop.f32.mrf.mxu0
    %v210 = vadd.f32 %v60, %v209
    %211 = vmatprep.mubr.f32.mxu0 0.0
    %212 = vmatmul.mubr.f32.gmra.mxu0 %v94
    %v213 = vpop.f32.mrf.mxu0
    %v214 = vadd.f32 %v65, %v213
    %v215 = vpop.f32.mrf.mxu0
    %v216 = vadd.f32 %v65, %v215
    %217 = vdwg.mxu0
    %218 = vmatprep.subr.mxu0 0.0
    %219 = vmatpush1.msra.mxu0 0.0
    %220 = vmatprep.subr.mxu0 0.0
    %221 = vmatpush1.msra.mxu0 0.0
    %222 = vmatprep.subr.mxu0 0.0
    %223 = vmatpush1.msra.mxu0 0.0
    %224 = vmatprep.subr.mxu0 0.0
    %225 = vmatpush1.msra.mxu0 0.0
    %226 = vmatprep.subr.mxu0 0.0
    %227 = vmatpush1.msra.mxu0 0.0
    %228 = vmatprep.subr.mxu0 0.0
    %229 = vmatpush1.msra.mxu0 0.0
    %230 = vmatprep.subr.mxu0 0.0
    %231 = vmatpush1.msra.mxu0 0.0
    %232 = vmatprep.subr.mxu0 0.0
    %233 = vmatpush1.msra.mxu0 0.0
    %234 = vmatprep.subr.mxu0 0.0
    %235 = vmatpush1.msra.mxu0 0.0
    %236 = vmatprep.subr.mxu0 0.0
    %237 = vmatpush1.msra.mxu0 0.0
    %238 = vmatprep.subr.mxu0 0.0
    %239 = vmatpush1.msra.mxu0 0.0
    %240 = vmatprep.subr.mxu0 0.0
    %241 = vmatpush1.msra.mxu0 0.0
    %242 = vmatprep.subr.mxu0 0.0
    %243 = vmatpush1.msra.mxu0 0.0
    %244 = vmatprep.subr.mxu0 0.0
    %245 = vmatpush1.msra.mxu0 0.0
    %246 = vmatprep.subr.mxu0 0.0
    %247 = vmatpush1.msra.mxu0 0.0
    %248 = vmatprep.subr.mxu0 %v103
    %249 = vmatpush1.msra.mxu0 %v101
    %250 = vmatprep.subr.mxu0 0.0
    %251 = vmatpush2.msra.mxu0 0.0
    %252 = vmatprep.subr.mxu0 0.0
    %253 = vmatpush2.msra.mxu0 0.0
    %254 = vmatprep.subr.mxu0 0.0
    %255 = vmatpush2.msra.mxu0 0.0
    %256 = vmatprep.subr.mxu0 0.0
    %257 = vmatpush2.msra.mxu0 0.0
    %258 = vmatprep.subr.mxu0 0.0
    %259 = vmatpush2.msra.mxu0 0.0
    %260 = vmatprep.subr.mxu0 0.0
    %261 = vmatpush2.msra.mxu0 0.0
    %262 = vmatprep.subr.mxu0 0.0
    %263 = vmatpush2.msra.mxu0 0.0
    %264 = vmatprep.subr.mxu0 0.0
    %265 = vmatpush2.msra.mxu0 0.0
    %266 = vmatprep.subr.mxu0 0.0
    %267 = vmatpush2.msra.mxu0 0.0
    %268 = vmatprep.subr.mxu0 0.0
    %269 = vmatpush2.msra.mxu0 0.0
    %270 = vmatprep.subr.mxu0 0.0
    %271 = vmatpush2.msra.mxu0 0.0
    %272 = vmatprep.subr.mxu0 0.0
    %273 = vmatpush2.msra.mxu0 0.0
    %274 = vmatprep.subr.mxu0 0.0
    %275 = vmatpush2.msra.mxu0 0.0
    %276 = vmatprep.subr.mxu0 0.0
    %277 = vmatpush2.msra.mxu0 0.0
    %278 = vmatprep.subr.mxu0 0.0
    %279 = vmatpush2.msra.mxu0 0.0
    %280 = vmatprep.subr.mxu0 0.0
    %281 = vmatpush2.msra.mxu0 0.0
    %282 = vmatprep.mubr.f32.mxu0 0.0
    %283 = vmatmul.mubr.f32.gmra.mxu0 %v85
    %v284 = vpop.f32.mrf.mxu0
    %v285 = vadd.f32 %v50, %v284
    %v286 = vpop.f32.mrf.mxu0
    %v287 = vadd.f32 %v50, %v286
    %288 = vmatprep.mubr.f32.mxu0 0.0
    %289 = vmatmul.mubr.f32.gmra.mxu0 %v88
    %v290 = vpop.f32.mrf.mxu0
    %v291 = vadd.f32 %v55, %v290
    %v292 = vpop.f32.mrf.mxu0
    %v293 = vadd.f32 %v55, %v292
    %294 = vmatprep.mubr.f32.mxu0 0.0
    %295 = vmatmul.mubr.f32.gmra.mxu0 %v91
    %v296 = vpop.f32.mrf.mxu0
    %v297 = vadd.f32 %v60, %v296
    %v298 = vpop.f32.mrf.mxu0
    %v299 = vadd.f32 %v60, %v298
    %300 = vmatprep.mubr.f32.mxu0 0.0
    %301 = vmatmul.mubr.f32.gmra.mxu0 %v94
    %v302 = vpop.f32.mrf.mxu0
    %v303 = vadd.f32 %v65, %v302
    %v304 = vpop.f32.mrf.mxu0
    %v305 = vadd.f32 %v65, %v304
    %306 = vdwg.mxu0
    %307 = vmatprep.subr.mxu0 0.0
    %308 = vmatpush1.msra.mxu0 0.0
    %309 = vmatprep.subr.mxu0 0.0
    %310 = vmatpush1.msra.mxu0 0.0
    %311 = vmatprep.subr.mxu0 0.0
    %312 = vmatpush1.msra.mxu0 0.0
    %313 = vmatprep.subr.mxu0 0.0
    %314 = vmatpush1.msra.mxu0 0.0
    %315 = vmatprep.subr.mxu0 0.0
    %316 = vmatpush1.msra.mxu0 0.0
    %317 = vmatprep.subr.mxu0 0.0
    %318 = vmatpush1.msra.mxu0 0.0
    %319 = vmatprep.subr.mxu0 0.0
    %320 = vmatpush1.msra.mxu0 0.0
    %321 = vmatprep.subr.mxu0 0.0
    %322 = vmatpush1.msra.mxu0 0.0
    %323 = vmatprep.subr.mxu0 0.0
    %324 = vmatpush1.msra.mxu0 0.0
    %325 = vmatprep.subr.mxu0 0.0
    %326 = vmatpush1.msra.mxu0 0.0
    %327 = vmatprep.subr.mxu0 0.0
    %328 = vmatpush1.msra.mxu0 0.0
    %329 = vmatprep.subr.mxu0 0.0
    %330 = vmatpush1.msra.mxu0 0.0
    %331 = vmatprep.subr.mxu0 0.0
    %332 = vmatpush1.msra.mxu0 0.0
    %333 = vmatprep.subr.mxu0 0.0
    %334 = vmatpush1.msra.mxu0 0.0
    %335 = vmatprep.subr.mxu0 0.0
    %336 = vmatpush1.msra.mxu0 0.0
    %337 = vmatprep.subr.mxu0 %v107
    %338 = vmatpush1.msra.mxu0 %v105
    %339 = vmatprep.subr.mxu0 0.0
    %340 = vmatpush2.msra.mxu0 0.0
    %341 = vmatprep.subr.mxu0 0.0
    %342 = vmatpush2.msra.mxu0 0.0
    %343 = vmatprep.subr.mxu0 0.0
    %344 = vmatpush2.msra.mxu0 0.0
    %345 = vmatprep.subr.mxu0 0.0
    %346 = vmatpush2.msra.mxu0 0.0
    %347 = vmatprep.subr.mxu0 0.0
    %348 = vmatpush2.msra.mxu0 0.0
    %349 = vmatprep.subr.mxu0 0.0
    %350 = vmatpush2.msra.mxu0 0.0
    %351 = vmatprep.subr.mxu0 0.0
    %352 = vmatpush2.msra.mxu0 0.0
    %353 = vmatprep.subr.mxu0 0.0
    %354 = vmatpush2.msra.mxu0 0.0
    %355 = vmatprep.subr.mxu0 0.0
    %356 = vmatpush2.msra.mxu0 0.0
    %357 = vmatprep.subr.mxu0 0.0
    %358 = vmatpush2.msra.mxu0 0.0
    %359 = vmatprep.subr.mxu0 0.0
    %360 = vmatpush2.msra.mxu0 0.0
    %361 = vmatprep.subr.mxu0 0.0
    %362 = vmatpush2.msra.mxu0 0.0
    %363 = vmatprep.subr.mxu0 0.0
    %364 = vmatpush2.msra.mxu0 0.0
    %365 = vmatprep.subr.mxu0 0.0
    %366 = vmatpush2.msra.mxu0 0.0
    %367 = vmatprep.subr.mxu0 0.0
    %368 = vmatpush2.msra.mxu0 0.0
    %369 = vmatprep.subr.mxu0 0.0
    %370 = vmatpush2.msra.mxu0 0.0
    %371 = vmatprep.mubr.f32.mxu0 0.0
    %372 = vmatmul.mubr.f32.gmra.mxu0 %v85
    %v373 = vpop.f32.mrf.mxu0
    %v374 = vadd.f32 %v50, %v373
    %v375 = vpop.f32.mrf.mxu0
    %v376 = vadd.f32 %v50, %v375
    %377 = vmatprep.mubr.f32.mxu0 0.0
    %378 = vmatmul.mubr.f32.gmra.mxu0 %v88
    %v379 = vpop.f32.mrf.mxu0
    %v380 = vadd.f32 %v55, %v379
    %v381 = vpop.f32.mrf.mxu0
    %v382 = vadd.f32 %v55, %v381
    %383 = vmatprep.mubr.f32.mxu0 0.0
    %384 = vmatmul.mubr.f32.gmra.mxu0 %v91
    %v385 = vpop.f32.mrf.mxu0
    %v386 = vadd.f32 %v60, %v385
    %v387 = vpop.f32.mrf.mxu0
    %v388 = vadd.f32 %v60, %v387
    %389 = vmatprep.mubr.f32.mxu0 0.0
    %390 = vmatmul.mubr.f32.gmra.mxu0 %v94
    %v391 = vpop.f32.mrf.mxu0
    %v392 = vadd.f32 %v65, %v391
    %v393 = vpop.f32.mrf.mxu0
    %v394 = vadd.f32 %v65, %v393
    %395 = vdwg.mxu0
    %396 = vmatprep.subr.mxu0 0.0
    %397 = vmatpush1.msra.mxu0 0.0
    %398 = vmatprep.subr.mxu0 0.0
    %399 = vmatpush1.msra.mxu0 0.0
    %400 = vmatprep.subr.mxu0 0.0
    %401 = vmatpush1.msra.mxu0 0.0
    %402 = vmatprep.subr.mxu0 0.0
    %403 = vmatpush1.msra.mxu0 0.0
    %404 = vmatprep.subr.mxu0 0.0
    %405 = vmatpush1.msra.mxu0 0.0
    %406 = vmatprep.subr.mxu0 0.0
    %407 = vmatpush1.msra.mxu0 0.0
    %408 = vmatprep.subr.mxu0 0.0
    %409 = vmatpush1.msra.mxu0 0.0
    %410 = vmatprep.subr.mxu0 0.0
    %411 = vmatpush1.msra.mxu0 0.0
    %412 = vmatprep.subr.mxu0 0.0
    %413 = vmatpush1.msra.mxu0 0.0
    %414 = vmatprep.subr.mxu0 0.0
    %415 = vmatpush1.msra.mxu0 0.0
    %416 = vmatprep.subr.mxu0 0.0
    %417 = vmatpush1.msra.mxu0 0.0
    %418 = vmatprep.subr.mxu0 0.0
    %419 = vmatpush1.msra.mxu0 0.0
    %420 = vmatprep.subr.mxu0 0.0
    %421 = vmatpush1.msra.mxu0 0.0
    %422 = vmatprep.subr.mxu0 0.0
    %423 = vmatpush1.msra.mxu0 0.0
    %424 = vmatprep.subr.mxu0 0.0
    %425 = vmatpush1.msra.mxu0 0.0
    %426 = vmatprep.subr.mxu0 %v111
    %427 = vmatpush1.msra.mxu0 %v109
    %428 = vmatprep.subr.mxu0 0.0
    %429 = vmatpush2.msra.mxu0 0.0
    %430 = vmatprep.subr.mxu0 0.0
    %431 = vmatpush2.msra.mxu0 0.0
    %432 = vmatprep.subr.mxu0 0.0
    %433 = vmatpush2.msra.mxu0 0.0
    %434 = vmatprep.subr.mxu0 0.0
    %435 = vmatpush2.msra.mxu0 0.0
    %436 = vmatprep.subr.mxu0 0.0
    %437 = vmatpush2.msra.mxu0 0.0
    %438 = vmatprep.subr.mxu0 0.0
    %439 = vmatpush2.msra.mxu0 0.0
    %440 = vmatprep.subr.mxu0 0.0
    %441 = vmatpush2.msra.mxu0 0.0
    %442 = vmatprep.subr.mxu0 0.0
    %443 = vmatpush2.msra.mxu0 0.0
    %444 = vmatprep.subr.mxu0 0.0
    %445 = vmatpush2.msra.mxu0 0.0
    %446 = vmatprep.subr.mxu0 0.0
    %447 = vmatpush2.msra.mxu0 0.0
    %448 = vmatprep.subr.mxu0 0.0
    %449 = vmatpush2.msra.mxu0 0.0
    %450 = vmatprep.subr.mxu0 0.0
    %451 = vmatpush2.msra.mxu0 0.0
    %452 = vmatprep.subr.mxu0 0.0
    %453 = vmatpush2.msra.mxu0 0.0
    %454 = vmatprep.subr.mxu0 0.0
    %455 = vmatpush2.msra.mxu0 0.0
    %456 = vmatprep.subr.mxu0 0.0
    %457 = vmatpush2.msra.mxu0 0.0
    %458 = vmatprep.subr.mxu0 0.0
    %459 = vmatpush2.msra.mxu0 0.0
    %460 = vmatprep.mubr.f32.mxu0 0.0
    %461 = vmatmul.mubr.f32.gmra.mxu0 %v85
    %v462 = vpop.f32.mrf.mxu0
    %v463 = vadd.f32 %v50, %v462
    %v464 = vpop.f32.mrf.mxu0
    %v465 = vadd.f32 %v50, %v464
    %466 = vmatprep.mubr.f32.mxu0 0.0
    %467 = vmatmul.mubr.f32.gmra.mxu0 %v88
    %v468 = vpop.f32.mrf.mxu0
    %v469 = vadd.f32 %v55, %v468
    %v470 = vpop.f32.mrf.mxu0
    %v471 = vadd.f32 %v55, %v470
    %472 = vmatprep.mubr.f32.mxu0 0.0
    %473 = vmatmul.mubr.f32.gmra.mxu0 %v91
    %v474 = vpop.f32.mrf.mxu0
    %v475 = vadd.f32 %v60, %v474
    %v476 = vpop.f32.mrf.mxu0
    %v477 = vadd.f32 %v60, %v476
    %478 = vmatprep.mubr.f32.mxu0 0.0
    %479 = vmatmul.mubr.f32.gmra.mxu0 %v94
    %v480 = vpop.f32.mrf.mxu0
    %v481 = vadd.f32 %v65, %v480
    %v482 = vpop.f32.mrf.mxu0
    %v483 = vadd.f32 %v65, %v482
    %484 = vdwg.mxu0
    %485 = vmatprep.subr.mxu0 0.0
    %486 = vmatpush1.msra.mxu0 0.0
    %487 = vmatprep.subr.mxu0 0.0
    %488 = vmatpush1.msra.mxu0 0.0
    %489 = vmatprep.subr.mxu0 0.0
    %490 = vmatpush1.msra.mxu0 0.0
    %491 = vmatprep.subr.mxu0 0.0
    %492 = vmatpush1.msra.mxu0 0.0
    %493 = vmatprep.subr.mxu0 0.0
    %494 = vmatpush1.msra.mxu0 0.0
    %495 = vmatprep.subr.mxu0 0.0
    %496 = vmatpush1.msra.mxu0 0.0
    %497 = vmatprep.subr.mxu0 0.0
    %498 = vmatpush1.msra.mxu0 0.0
    %499 = vmatprep.subr.mxu0 0.0
    %500 = vmatpush1.msra.mxu0 0.0
    %501 = vmatprep.subr.mxu0 0.0
    %502 = vmatpush1.msra.mxu0 0.0
    %503 = vmatprep.subr.mxu0 0.0
    %504 = vmatpush1.msra.mxu0 0.0
    %505 = vmatprep.subr.mxu0 0.0
    %506 = vmatpush1.msra.mxu0 0.0
    %507 = vmatprep.subr.mxu0 0.0
    %508 = vmatpush1.msra.mxu0 0.0
    %509 = vmatprep.subr.mxu0 0.0
    %510 = vmatpush1.msra.mxu0 0.0
    %511 = vmatprep.subr.mxu0 0.0
    %512 = vmatpush1.msra.mxu0 0.0
    %513 = vmatprep.subr.mxu0 0.0
    %514 = vmatpush1.msra.mxu0 0.0
    %515 = vmatprep.subr.mxu0 %v115
    %516 = vmatpush1.msra.mxu0 %v113
    %517 = vmatprep.subr.mxu0 0.0
    %518 = vmatpush2.msra.mxu0 0.0
    %519 = vmatprep.subr.mxu0 0.0
    %520 = vmatpush2.msra.mxu0 0.0
    %521 = vmatprep.subr.mxu0 0.0
    %522 = vmatpush2.msra.mxu0 0.0
    %523 = vmatprep.subr.mxu0 0.0
    %524 = vmatpush2.msra.mxu0 0.0
    %525 = vmatprep.subr.mxu0 0.0
    %526 = vmatpush2.msra.mxu0 0.0
    %527 = vmatprep.subr.mxu0 0.0
    %528 = vmatpush2.msra.mxu0 0.0
    %529 = vmatprep.subr.mxu0 0.0
    %530 = vmatpush2.msra.mxu0 0.0
    %531 = vmatprep.subr.mxu0 0.0
    %532 = vmatpush2.msra.mxu0 0.0
    %533 = vmatprep.subr.mxu0 0.0
    %534 = vmatpush2.msra.mxu0 0.0
    %535 = vmatprep.subr.mxu0 0.0
    %536 = vmatpush2.msra.mxu0 0.0
    %537 = vmatprep.subr.mxu0 0.0
    %538 = vmatpush2.msra.mxu0 0.0
    %539 = vmatprep.subr.mxu0 0.0
    %540 = vmatpush2.msra.mxu0 0.0
    %541 = vmatprep.subr.mxu0 0.0
    %542 = vmatpush2.msra.mxu0 0.0
    %543 = vmatprep.subr.mxu0 0.0
    %544 = vmatpush2.msra.mxu0 0.0
    %545 = vmatprep.subr.mxu0 0.0
    %546 = vmatpush2.msra.mxu0 0.0
    %547 = vmatprep.subr.mxu0 0.0
    %548 = vmatpush2.msra.mxu0 0.0
    %549 = vmatprep.mubr.f32.mxu0 0.0
    %550 = vmatmul.mubr.f32.gmra.mxu0 %v85
    %v551 = vpop.f32.mrf.mxu0
    %v552 = vadd.f32 %v50, %v551
    %v553 = vpop.f32.mrf.mxu0
    %v554 = vadd.f32 %v50, %v553
    %555 = vmatprep.mubr.f32.mxu0 0.0
    %556 = vmatmul.mubr.f32.gmra.mxu0 %v88
    %v557 = vpop.f32.mrf.mxu0
    %v558 = vadd.f32 %v55, %v557
    %v559 = vpop.f32.mrf.mxu0
    %v560 = vadd.f32 %v55, %v559
    %561 = vmatprep.mubr.f32.mxu0 0.0
    %562 = vmatmul.mubr.f32.gmra.mxu0 %v91
    %v563 = vpop.f32.mrf.mxu0
    %v564 = vadd.f32 %v60, %v563
    %v565 = vpop.f32.mrf.mxu0
    %v566 = vadd.f32 %v60, %v565
    %567 = vmatprep.mubr.f32.mxu0 0.0
    %568 = vmatmul.mubr.f32.gmra.mxu0 %v94
    %v569 = vpop.f32.mrf.mxu0
    %v570 = vadd.f32 %v65, %v569
    %v571 = vpop.f32.mrf.mxu0
    %v572 = vadd.f32 %v65, %v571
    %573 = vdwg.mxu0
    %574 = vmatprep.subr.mxu0 0.0
    %575 = vmatpush1.msra.mxu0 0.0
    %576 = vmatprep.subr.mxu0 0.0
    %577 = vmatpush1.msra.mxu0 0.0
    %578 = vmatprep.subr.mxu0 0.0
    %579 = vmatpush1.msra.mxu0 0.0
    %580 = vmatprep.subr.mxu0 0.0
    %581 = vmatpush1.msra.mxu0 0.0
    %582 = vmatprep.subr.mxu0 0.0
    %583 = vmatpush1.msra.mxu0 0.0
    %584 = vmatprep.subr.mxu0 0.0
    %585 = vmatpush1.msra.mxu0 0.0
    %586 = vmatprep.subr.mxu0 0.0
    %587 = vmatpush1.msra.mxu0 0.0
    %588 = vmatprep.subr.mxu0 0.0
    %589 = vmatpush1.msra.mxu0 0.0
    %590 = vmatprep.subr.mxu0 0.0
    %591 = vmatpush1.msra.mxu0 0.0
    %592 = vmatprep.subr.mxu0 0.0
    %593 = vmatpush1.msra.mxu0 0.0
    %594 = vmatprep.subr.mxu0 0.0
    %595 = vmatpush1.msra.mxu0 0.0
    %596 = vmatprep.subr.mxu0 0.0
    %597 = vmatpush1.msra.mxu0 0.0
    %598 = vmatprep.subr.mxu0 0.0
    %599 = vmatpush1.msra.mxu0 0.0
    %600 = vmatprep.subr.mxu0 0.0
    %601 = vmatpush1.msra.mxu0 0.0
    %602 = vmatprep.subr.mxu0 0.0
    %603 = vmatpush1.msra.mxu0 0.0
    %604 = vmatprep.subr.mxu0 %v119
    %605 = vmatpush1.msra.mxu0 %v117
    %606 = vmatprep.subr.mxu0 0.0
    %607 = vmatpush2.msra.mxu0 0.0
    %608 = vmatprep.subr.mxu0 0.0
    %609 = vmatpush2.msra.mxu0 0.0
    %610 = vmatprep.subr.mxu0 0.0
    %611 = vmatpush2.msra.mxu0 0.0
    %612 = vmatprep.subr.mxu0 0.0
    %613 = vmatpush2.msra.mxu0 0.0
    %614 = vmatprep.subr.mxu0 0.0
    %615 = vmatpush2.msra.mxu0 0.0
    %616 = vmatprep.subr.mxu0 0.0
    %617 = vmatpush2.msra.mxu0 0.0
    %618 = vmatprep.subr.mxu0 0.0
    %619 = vmatpush2.msra.mxu0 0.0
    %620 = vmatprep.subr.mxu0 0.0
    %621 = vmatpush2.msra.mxu0 0.0
    %622 = vmatprep.subr.mxu0 0.0
    %623 = vmatpush2.msra.mxu0 0.0
    %624 = vmatprep.subr.mxu0 0.0
    %625 = vmatpush2.msra.mxu0 0.0
    %626 = vmatprep.subr.mxu0 0.0
    %627 = vmatpush2.msra.mxu0 0.0
    %628 = vmatprep.subr.mxu0 0.0
    %629 = vmatpush2.msra.mxu0 0.0
    %630 = vmatprep.subr.mxu0 0.0
    %631 = vmatpush2.msra.mxu0 0.0
    %632 = vmatprep.subr.mxu0 0.0
    %633 = vmatpush2.msra.mxu0 0.0
    %634 = vmatprep.subr.mxu0 0.0
    %635 = vmatpush2.msra.mxu0 0.0
    %636 = vmatprep.subr.mxu0 0.0
    %637 = vmatpush2.msra.mxu0 0.0
    %638 = vmatprep.mubr.f32.mxu0 0.0
    %639 = vmatmul.mubr.f32.gmra.mxu0 %v85
    %v640 = vpop.f32.mrf.mxu0
    %v641 = vadd.f32 %v50, %v640
    %v642 = vpop.f32.mrf.mxu0
    %v643 = vadd.f32 %v50, %v642
    %644 = vmatprep.mubr.f32.mxu0 0.0
    %645 = vmatmul.mubr.f32.gmra.mxu0 %v88
    %v646 = vpop.f32.mrf.mxu0
    %v647 = vadd.f32 %v55, %v646
    %v648 = vpop.f32.mrf.mxu0
    %v649 = vadd.f32 %v55, %v648
    %650 = vmatprep.mubr.f32.mxu0 0.0
    %651 = vmatmul.mubr.f32.gmra.mxu0 %v91
    %v652 = vpop.f32.mrf.mxu0
    %v653 = vadd.f32 %v60, %v652
    %v654 = vpop.f32.mrf.mxu0
    %v655 = vadd.f32 %v60, %v654
    %656 = vmatprep.mubr.f32.mxu0 0.0
    %657 = vmatmul.mubr.f32.gmra.mxu0 %v94
    %v658 = vpop.f32.mrf.mxu0
    %v659 = vadd.f32 %v65, %v658
    %v660 = vpop.f32.mrf.mxu0
    %v661 = vadd.f32 %v65, %v660
    %662 = vdwg.mxu0
    %663 = vmatprep.subr.mxu0 0.0
    %664 = vmatpush1.msra.mxu0 0.0
    %665 = vmatprep.subr.mxu0 0.0
    %666 = vmatpush1.msra.mxu0 0.0
    %667 = vmatprep.subr.mxu0 0.0
    %668 = vmatpush1.msra.mxu0 0.0
    %669 = vmatprep.subr.mxu0 0.0
    %670 = vmatpush1.msra.mxu0 0.0
    %671 = vmatprep.subr.mxu0 0.0
    %672 = vmatpush1.msra.mxu0 0.0
    %673 = vmatprep.subr.mxu0 0.0
    %674 = vmatpush1.msra.mxu0 0.0
    %675 = vmatprep.subr.mxu0 0.0
    %676 = vmatpush1.msra.mxu0 0.0
    %677 = vmatprep.subr.mxu0 0.0
    %678 = vmatpush1.msra.mxu0 0.0
    %679 = vmatprep.subr.mxu0 0.0
    %680 = vmatpush1.msra.mxu0 0.0
    %681 = vmatprep.subr.mxu0 0.0
    %682 = vmatpush1.msra.mxu0 0.0
    %683 = vmatprep.subr.mxu0 0.0
    %684 = vmatpush1.msra.mxu0 0.0
    %685 = vmatprep.subr.mxu0 0.0
    %686 = vmatpush1.msra.mxu0 0.0
    %687 = vmatprep.subr.mxu0 0.0
    %688 = vmatpush1.msra.mxu0 0.0
    %689 = vmatprep.subr.mxu0 0.0
    %690 = vmatpush1.msra.mxu0 0.0
    %691 = vmatprep.subr.mxu0 0.0
    %692 = vmatpush1.msra.mxu0 0.0
    %693 = vmatprep.subr.mxu0 %v123
    %694 = vmatpush1.msra.mxu0 %v121
    %695 = vmatprep.subr.mxu0 0.0
    %696 = vmatpush2.msra.mxu0 0.0
    %697 = vmatprep.subr.mxu0 0.0
    %698 = vmatpush2.msra.mxu0 0.0
    %699 = vmatprep.subr.mxu0 0.0
    %700 = vmatpush2.msra.mxu0 0.0
    %701 = vmatprep.subr.mxu0 0.0
    %702 = vmatpush2.msra.mxu0 0.0
    %703 = vmatprep.subr.mxu0 0.0
    %704 = vmatpush2.msra.mxu0 0.0
    %705 = vmatprep.subr.mxu0 0.0
    %706 = vmatpush2.msra.mxu0 0.0
    %707 = vmatprep.subr.mxu0 0.0
    %708 = vmatpush2.msra.mxu0 0.0
    %709 = vmatprep.subr.mxu0 0.0
    %710 = vmatpush2.msra.mxu0 0.0
    %711 = vmatprep.subr.mxu0 0.0
    %712 = vmatpush2.msra.mxu0 0.0
    %713 = vmatprep.subr.mxu0 0.0
    %714 = vmatpush2.msra.mxu0 0.0
    %715 = vmatprep.subr.mxu0 0.0
    %716 = vmatpush2.msra.mxu0 0.0
    %717 = vmatprep.subr.mxu0 0.0
    %718 = vmatpush2.msra.mxu0 0.0
    %719 = vmatprep.subr.mxu0 0.0
    %720 = vmatpush2.msra.mxu0 0.0
    %721 = vmatprep.subr.mxu0 0.0
    %722 = vmatpush2.msra.mxu0 0.0
    %723 = vmatprep.subr.mxu0 0.0
    %724 = vmatpush2.msra.mxu0 0.0
    %725 = vmatprep.subr.mxu0 0.0
    %726 = vmatpush2.msra.mxu0 0.0
    %727 = vmatprep.mubr.f32.mxu0 0.0
    %728 = vmatmul.mubr.f32.gmra.mxu0 %v85
    %v729 = vpop.f32.mrf.mxu0
    %v730 = vadd.f32 %v50, %v729
    %v731 = vpop.f32.mrf.mxu0
    %v732 = vadd.f32 %v50, %v731
    %733 = vmatprep.mubr.f32.mxu0 0.0
    %734 = vmatmul.mubr.f32.gmra.mxu0 %v88
    %v735 = vpop.f32.mrf.mxu0
    %v736 = vadd.f32 %v55, %v735
    %v737 = vpop.f32.mrf.mxu0
    %v738 = vadd.f32 %v55, %v737
    %739 = vmatprep.mubr.f32.mxu0 0.0
    %740 = vmatmul.mubr.f32.gmra.mxu0 %v91
    %v741 = vpop.f32.mrf.mxu0
    %v742 = vadd.f32 %v60, %v741
    %v743 = vpop.f32.mrf.mxu0
    %v744 = vadd.f32 %v60, %v743
    %745 = vmatprep.mubr.f32.mxu0 0.0
    %746 = vmatmul.mubr.f32.gmra.mxu0 %v94
    %v747 = vpop.f32.mrf.mxu0
    %v748 = vadd.f32 %v65, %v747
    %v749 = vpop.f32.mrf.mxu0
    %v750 = vadd.f32 %v65, %v749
    %751 = vdwg.mxu0
    %752 = vmatprep.subr.mxu0 0.0
    %753 = vmatpush1.msra.mxu0 0.0
    %754 = vmatprep.subr.mxu0 0.0
    %755 = vmatpush1.msra.mxu0 0.0
    %756 = vmatprep.subr.mxu0 0.0
    %757 = vmatpush1.msra.mxu0 0.0
    %758 = vmatprep.subr.mxu0 0.0
    %759 = vmatpush1.msra.mxu0 0.0
    %760 = vmatprep.subr.mxu0 0.0
    %761 = vmatpush1.msra.mxu0 0.0
    %762 = vmatprep.subr.mxu0 0.0
    %763 = vmatpush1.msra.mxu0 0.0
    %764 = vmatprep.subr.mxu0 0.0
    %765 = vmatpush1.msra.mxu0 0.0
    %766 = vmatprep.subr.mxu0 0.0
    %767 = vmatpush1.msra.mxu0 0.0
    %768 = vmatprep.subr.mxu0 0.0
    %769 = vmatpush1.msra.mxu0 0.0
    %770 = vmatprep.subr.mxu0 0.0
    %771 = vmatpush1.msra.mxu0 0.0
    %772 = vmatprep.subr.mxu0 0.0
    %773 = vmatpush1.msra.mxu0 0.0
    %774 = vmatprep.subr.mxu0 0.0
    %775 = vmatpush1.msra.mxu0 0.0
    %776 = vmatprep.subr.mxu0 0.0
    %777 = vmatpush1.msra.mxu0 0.0
    %778 = vmatprep.subr.mxu0 0.0
    %779 = vmatpush1.msra.mxu0 0.0
    %780 = vmatprep.subr.mxu0 0.0
    %781 = vmatpush1.msra.mxu0 0.0
    %782 = vmatprep.subr.mxu0 %v127
    %783 = vmatpush1.msra.mxu0 %v125
    %784 = vmatprep.subr.mxu0 0.0
    %785 = vmatpush2.msra.mxu0 0.0
    %786 = vmatprep.subr.mxu0 0.0
    %787 = vmatpush2.msra.mxu0 0.0
    %788 = vmatprep.subr.mxu0 0.0
    %789 = vmatpush2.msra.mxu0 0.0
    %790 = vmatprep.subr.mxu0 0.0
    %791 = vmatpush2.msra.mxu0 0.0
    %792 = vmatprep.subr.mxu0 0.0
    %793 = vmatpush2.msra.mxu0 0.0
    %794 = vmatprep.subr.mxu0 0.0
    %795 = vmatpush2.msra.mxu0 0.0
    %796 = vmatprep.subr.mxu0 0.0
    %797 = vmatpush2.msra.mxu0 0.0
    %798 = vmatprep.subr.mxu0 0.0
    %799 = vmatpush2.msra.mxu0 0.0
    %800 = vmatprep.subr.mxu0 0.0
    %801 = vmatpush2.msra.mxu0 0.0
    %802 = vmatprep.subr.mxu0 0.0
    %803 = vmatpush2.msra.mxu0 0.0
    %804 = vmatprep.subr.mxu0 0.0
    %805 = vmatpush2.msra.mxu0 0.0
    %806 = vmatprep.subr.mxu0 0.0
    %807 = vmatpush2.msra.mxu0 0.0
    %808 = vmatprep.subr.mxu0 0.0
    %809 = vmatpush2.msra.mxu0 0.0
    %810 = vmatprep.subr.mxu0 0.0
    %811 = vmatpush2.msra.mxu0 0.0
    %812 = vmatprep.subr.mxu0 0.0
    %813 = vmatpush2.msra.mxu0 0.0
    %814 = vmatprep.subr.mxu0 0.0
    %815 = vmatpush2.msra.mxu0 0.0
    %816 = vmatprep.mubr.f32.mxu0 0.0
    %817 = vmatmul.mubr.f32.gmra.mxu0 %v85
    %v818 = vpop.f32.mrf.mxu0
    %v819 = vadd.f32 %v50, %v818
    %v820 = vpop.f32.mrf.mxu0
    %v821 = vadd.f32 %v50, %v820
    %822 = vmatprep.mubr.f32.mxu0 0.0
    %823 = vmatmul.mubr.f32.gmra.mxu0 %v88
    %v824 = vpop.f32.mrf.mxu0
    %v825 = vadd.f32 %v55, %v824
    %v826 = vpop.f32.mrf.mxu0
    %v827 = vadd.f32 %v55, %v826
    %828 = vmatprep.mubr.f32.mxu0 0.0
    %829 = vmatmul.mubr.f32.gmra.mxu0 %v91
    %v830 = vpop.f32.mrf.mxu0
    %v831 = vadd.f32 %v60, %v830
    %v832 = vpop.f32.mrf.mxu0
    %v833 = vadd.f32 %v60, %v832
    %834 = vmatprep.mubr.f32.mxu0 0.0
    %835 = vmatmul.mubr.f32.gmra.mxu0 %v94
    %v836 = vpop.f32.mrf.mxu0
    %v837 = vadd.f32 %v65, %v836
    %v838 = vpop.f32.mrf.mxu0
    %v839 = vadd.f32 %v65, %v838
    %840 = vdwg.mxu0
    %v841 = vmax.f32 %v196, 0.0
    %v842 = vmax.f32 %v198, 0.0
    %v843 = vmax.f32 %v285, 0.0
    %v844 = vmax.f32 %v287, 0.0
    %v845 = vmax.f32 %v374, 0.0
    %v846 = vmax.f32 %v376, 0.0
    %v847 = vmax.f32 %v463, 0.0
    %v848 = vmax.f32 %v465, 0.0
    %v849 = vmax.f32 %v552, 0.0
    %v850 = vmax.f32 %v554, 0.0
    %v851 = vmax.f32 %v641, 0.0
    %v852 = vmax.f32 %v643, 0.0
    %v853 = vmax.f32 %v730, 0.0
    %v854 = vmax.f32 %v732, 0.0
    %v855 = vmax.f32 %v819, 0.0
    %v856 = vmax.f32 %v821, 0.0
    %v857 = vmax.f32 %v202, 0.0
    %v858 = vmax.f32 %v204, 0.0
    %v859 = vmax.f32 %v291, 0.0
    %v860 = vmax.f32 %v293, 0.0
    %v861 = vmax.f32 %v380, 0.0
    %v862 = vmax.f32 %v382, 0.0
    %v863 = vmax.f32 %v469, 0.0
    %v864 = vmax.f32 %v471, 0.0
    %v865 = vmax.f32 %v558, 0.0
    %v866 = vmax.f32 %v560, 0.0
    %v867 = vmax.f32 %v647, 0.0
    %v868 = vmax.f32 %v649, 0.0
    %v869 = vmax.f32 %v736, 0.0
    %v870 = vmax.f32 %v738, 0.0
    %v871 = vmax.f32 %v825, 0.0
    %v872 = vmax.f32 %v827, 0.0
    %v873 = vmax.f32 %v208, 0.0
    %v874 = vmax.f32 %v210, 0.0
    %v875 = vmax.f32 %v297, 0.0
    %v876 = vmax.f32 %v299, 0.0
    %v877 = vmax.f32 %v386, 0.0
    %v878 = vmax.f32 %v388, 0.0
    %v879 = vmax.f32 %v475, 0.0
    %v880 = vmax.f32 %v477, 0.0
    %v881 = vmax.f32 %v564, 0.0
    %v882 = vmax.f32 %v566, 0.0
    %v883 = vmax.f32 %v653, 0.0
    %v884 = vmax.f32 %v655, 0.0
    %v885 = vmax.f32 %v742, 0.0
    %v886 = vmax.f32 %v744, 0.0
    %v887 = vmax.f32 %v831, 0.0
    %v888 = vmax.f32 %v833, 0.0
    %v889 = vmax.f32 %v214, 0.0
    %v890 = vmax.f32 %v216, 0.0
    %v891 = vmax.f32 %v303, 0.0
    %v892 = vmax.f32 %v305, 0.0
    %v893 = vmax.f32 %v392, 0.0
    %v894 = vmax.f32 %v394, 0.0
    %v895 = vmax.f32 %v481, 0.0
    %v896 = vmax.f32 %v483, 0.0
    %v897 = vmax.f32 %v570, 0.0
    %v898 = vmax.f32 %v572, 0.0
    %v899 = vmax.f32 %v659, 0.0
    %v900 = vmax.f32 %v661, 0.0
    %v901 = vmax.f32 %v748, 0.0
    %v902 = vmax.f32 %v750, 0.0
    %v903 = vmax.f32 %v837, 0.0
    %v904 = vmax.f32 %v839, 0.0
    %v905 = vld [vmem:[%s3] sm:$0xff]
    %v906 = vld [vmem:[%s3 + $0x8] sm:$0xff]
    %v907 = vld [vmem:[%s3 + $0x10] sm:$0xff]
    %v908 = vld [vmem:[%s3 + $0x18] sm:$0xff]
    %v909 = vld [vmem:[%s3 + $0x20] sm:$0xff]
    %v910 = vld [vmem:[%s3 + $0x28] sm:$0xff]
    %v911 = vld [vmem:[%s3 + $0x30] sm:$0xff]
    %v912 = vld [vmem:[%s3 + $0x38] sm:$0xff]
    %v913 = vld [vmem:[%s3 + $0x40] sm:$0xff]
    %v914 = vld [vmem:[%s3 + $0x48] sm:$0xff]
    %v915 = vld [vmem:[%s3 + $0x50] sm:$0xff]
    %v916 = vld [vmem:[%s3 + $0x58] sm:$0xff]
    %v917 = vld [vmem:[%s3 + $0x60] sm:$0xff]
    %v918 = vld [vmem:[%s3 + $0x68] sm:$0xff]
    %v919 = vld [vmem:[%s3 + $0x70] sm:$0xff]
    %v920 = vld [vmem:[%s3 + $0x78] sm:$0xff]
    %v921 = vld [vmem:[%s3 + $0x80] sm:$0xff]
    %v922 = vld [vmem:[%s3 + $0x88] sm:$0xff]
    %v923 = vld [vmem:[%s3 + $0x90] sm:$0xff]
    %v924 = vld [vmem:[%s3 + $0x98] sm:$0xff]
    %v925 = vld [vmem:[%s3 + $0xa0] sm:$0xff]
    %v926 = vld [vmem:[%s3 + $0xa8] sm:$0xff]
    %v927 = vld [vmem:[%s3 + $0xb0] sm:$0xff]
    %v928 = vld [vmem:[%s3 + $0xb8] sm:$0xff]
    %v929 = vld [vmem:[%s3 + $0xc0] sm:$0xff]
    %v930 = vld [vmem:[%s3 + $0xc8] sm:$0xff]
    %v931 = vld [vmem:[%s3 + $0xd0] sm:$0xff]
    %v932 = vld [vmem:[%s3 + $0xd8] sm:$0xff]
    %v933 = vld [vmem:[%s3 + $0xe0] sm:$0xff]
    %v934 = vld [vmem:[%s3 + $0xe8] sm:$0xff]
    %v935 = vld [vmem:[%s3 + $0xf0] sm:$0xff]
    %v936 = vld [vmem:[%s3 + $0xf8] sm:$0xff]
    %v937 = vld [vmem:[%s3 + $0x100] sm:$0xff]
    %v938 = vld [vmem:[%s3 + $0x108] sm:$0xff]
    %v939 = vld [vmem:[%s3 + $0x110] sm:$0xff]
    %v940 = vld [vmem:[%s3 + $0x118] sm:$0xff]
    %v941 = vld [vmem:[%s3 + $0x120] sm:$0xff]
    %v942 = vld [vmem:[%s3 + $0x128] sm:$0xff]
    %v943 = vld [vmem:[%s3 + $0x130] sm:$0xff]
    %v944 = vld [vmem:[%s3 + $0x138] sm:$0xff]
    %v945 = vld [vmem:[%s3 + $0x140] sm:$0xff]
    %v946 = vld [vmem:[%s3 + $0x148] sm:$0xff]
    %v947 = vld [vmem:[%s3 + $0x150] sm:$0xff]
    %v948 = vld [vmem:[%s3 + $0x158] sm:$0xff]
    %v949 = vld [vmem:[%s3 + $0x160] sm:$0xff]
    %v950 = vld [vmem:[%s3 + $0x168] sm:$0xff]
    %v951 = vld [vmem:[%s3 + $0x170] sm:$0xff]
    %v952 = vld [vmem:[%s3 + $0x178] sm:$0xff]
    %v953 = vld [vmem:[%s3 + $0x180] sm:$0xff]
    %v954 = vld [vmem:[%s3 + $0x188] sm:$0xff]
    %v955 = vld [vmem:[%s3 + $0x190] sm:$0xff]
    %v956 = vld [vmem:[%s3 + $0x198] sm:$0xff]
    %v957 = vld [vmem:[%s3 + $0x1a0] sm:$0xff]
    %v958 = vld [vmem:[%s3 + $0x1a8] sm:$0xff]
    %v959 = vld [vmem:[%s3 + $0x1b0] sm:$0xff]
    %v960 = vld [vmem:[%s3 + $0x1b8] sm:$0xff]
    %v961 = vld [vmem:[%s3 + $0x1c0] sm:$0xff]
    %v962 = vld [vmem:[%s3 + $0x1c8] sm:$0xff]
    %v963 = vld [vmem:[%s3 + $0x1d0] sm:$0xff]
    %v964 = vld [vmem:[%s3 + $0x1d8] sm:$0xff]
    %v965 = vld [vmem:[%s3 + $0x1e0] sm:$0xff]
    %v966 = vld [vmem:[%s3 + $0x1e8] sm:$0xff]
    %v967 = vld [vmem:[%s3 + $0x1f0] sm:$0xff]
    %v968 = vld [vmem:[%s3 + $0x1f8] sm:$0xff]
    %v969 = vld [vmem:[%s3 + $0x200] sm:$0xff]
    %v970 = vld [vmem:[%s3 + $0x208] sm:$0xff]
    %v971 = vld [vmem:[%s3 + $0x210] sm:$0xff]
    %v972 = vld [vmem:[%s3 + $0x218] sm:$0xff]
    %v973 = vld [vmem:[%s3 + $0x220] sm:$0xff]
    %v974 = vld [vmem:[%s3 + $0x228] sm:$0xff]
    %v975 = vld [vmem:[%s3 + $0x230] sm:$0xff]
    %v976 = vld [vmem:[%s3 + $0x238] sm:$0xff]
    %v977 = vld [vmem:[%s3 + $0x240] sm:$0xff]
    %v978 = vld [vmem:[%s3 + $0x248] sm:$0xff]
    %v979 = vld [vmem:[%s3 + $0x250] sm:$0xff]
    %v980 = vld [vmem:[%s3 + $0x258] sm:$0xff]
    %v981 = vld [vmem:[%s3 + $0x260] sm:$0xff]
    %v982 = vld [vmem:[%s3 + $0x268] sm:$0xff]
    %v983 = vld [vmem:[%s3 + $0x270] sm:$0xff]
    %v984 = vld [vmem:[%s3 + $0x278] sm:$0xff]
    %v985 = vld [vmem:[%s3 + $0x280] sm:$0xff]
    %v986 = vld [vmem:[%s3 + $0x288] sm:$0xff]
    %v987 = vld [vmem:[%s3 + $0x290] sm:$0xff]
    %v988 = vld [vmem:[%s3 + $0x298] sm:$0xff]
    %v989 = vld [vmem:[%s3 + $0x2a0] sm:$0xff]
    %v990 = vld [vmem:[%s3 + $0x2a8] sm:$0xff]
    %v991 = vld [vmem:[%s3 + $0x2b0] sm:$0xff]
    %v992 = vld [vmem:[%s3 + $0x2b8] sm:$0xff]
    %v993 = vld [vmem:[%s3 + $0x2c0] sm:$0xff]
    %v994 = vld [vmem:[%s3 + $0x2c8] sm:$0xff]
    %v995 = vld [vmem:[%s3 + $0x2d0] sm:$0xff]
    %v996 = vld [vmem:[%s3 + $0x2d8] sm:$0xff]
    %v997 = vld [vmem:[%s3 + $0x2e0] sm:$0xff]
    %v998 = vld [vmem:[%s3 + $0x2e8] sm:$0xff]
    %v999 = vld [vmem:[%s3 + $0x2f0] sm:$0xff]
    %v1000 = vld [vmem:[%s3 + $0x2f8] sm:$0xff]
    %v1001 = vld [vmem:[%s3 + $0x300] sm:$0xff]
    %v1002 = vld [vmem:[%s3 + $0x308] sm:$0xff]
    %v1003 = vld [vmem:[%s3 + $0x310] sm:$0xff]
    %v1004 = vld [vmem:[%s3 + $0x318] sm:$0xff]
    %v1005 = vld [vmem:[%s3 + $0x320] sm:$0xff]
    %v1006 = vld [vmem:[%s3 + $0x328] sm:$0xff]
    %v1007 = vld [vmem:[%s3 + $0x330] sm:$0xff]
    %v1008 = vld [vmem:[%s3 + $0x338] sm:$0xff]
    %v1009 = vld [vmem:[%s3 + $0x340] sm:$0xff]
    %v1010 = vld [vmem:[%s3 + $0x348] sm:$0xff]
    %v1011 = vld [vmem:[%s3 + $0x350] sm:$0xff]
    %v1012 = vld [vmem:[%s3 + $0x358] sm:$0xff]
    %v1013 = vld [vmem:[%s3 + $0x360] sm:$0xff]
    %v1014 = vld [vmem:[%s3 + $0x368] sm:$0xff]
    %v1015 = vld [vmem:[%s3 + $0x370] sm:$0xff]
    %v1016 = vld [vmem:[%s3 + $0x378] sm:$0xff]
    %v1017 = vld [vmem:[%s3 + $0x380] sm:$0xff]
    %v1018 = vld [vmem:[%s3 + $0x388] sm:$0xff]
    %v1019 = vld [vmem:[%s3 + $0x390] sm:$0xff]
    %v1020 = vld [vmem:[%s3 + $0x398] sm:$0xff]
    %v1021 = vld [vmem:[%s3 + $0x3a0] sm:$0xff]
    %v1022 = vld [vmem:[%s3 + $0x3a8] sm:$0xff]
    %v1023 = vld [vmem:[%s3 + $0x3b0] sm:$0xff]
    %v1024 = vld [vmem:[%s3 + $0x3b8] sm:$0xff]
    %v1025 = vld [vmem:[%s3 + $0x3c0] sm:$0xff]
    %v1026 = vld [vmem:[%s3 + $0x3c8] sm:$0xff]
    %v1027 = vld [vmem:[%s3 + $0x3d0] sm:$0xff]
    %v1028 = vld [vmem:[%s3 + $0x3d8] sm:$0xff]
    %v1029 = vld [vmem:[%s3 + $0x3e0] sm:$0xff]
    %v1030 = vld [vmem:[%s3 + $0x3e8] sm:$0xff]
    %v1031 = vld [vmem:[%s3 + $0x3f0] sm:$0xff]
    %v1032 = vld [vmem:[%s3 + $0x3f8] sm:$0xff]
    %v1033 = vld [vmem:[%s3 + $0x400] sm:$0xff]
    %v1034 = vld [vmem:[%s3 + $0x408] sm:$0xff]
    %v1035 = vld [vmem:[%s3 + $0x410] sm:$0xff]
    %v1036 = vld [vmem:[%s3 + $0x418] sm:$0xff]
    %v1037 = vld [vmem:[%s3 + $0x420] sm:$0xff]
    %v1038 = vld [vmem:[%s3 + $0x428] sm:$0xff]
    %v1039 = vld [vmem:[%s3 + $0x430] sm:$0xff]
    %v1040 = vld [vmem:[%s3 + $0x438] sm:$0xff]
    %v1041 = vld [vmem:[%s3 + $0x440] sm:$0xff]
    %v1042 = vld [vmem:[%s3 + $0x448] sm:$0xff]
    %v1043 = vld [vmem:[%s3 + $0x450] sm:$0xff]
    %v1044 = vld [vmem:[%s3 + $0x458] sm:$0xff]
    %v1045 = vld [vmem:[%s3 + $0x460] sm:$0xff]
    %v1046 = vld [vmem:[%s3 + $0x468] sm:$0xff]
    %v1047 = vld [vmem:[%s3 + $0x470] sm:$0xff]
    %v1048 = vld [vmem:[%s3 + $0x478] sm:$0xff]
    %v1049 = vld [vmem:[%s3 + $0x480] sm:$0xff]
    %v1050 = vld [vmem:[%s3 + $0x488] sm:$0xff]
    %v1051 = vld [vmem:[%s3 + $0x490] sm:$0xff]
    %v1052 = vld [vmem:[%s3 + $0x498] sm:$0xff]
    %v1053 = vld [vmem:[%s3 + $0x4a0] sm:$0xff]
    %v1054 = vld [vmem:[%s3 + $0x4a8] sm:$0xff]
    %v1055 = vld [vmem:[%s3 + $0x4b0] sm:$0xff]
    %v1056 = vld [vmem:[%s3 + $0x4b8] sm:$0xff]
    %v1057 = vld [vmem:[%s3 + $0x4c0] sm:$0xff]
    %v1058 = vld [vmem:[%s3 + $0x4c8] sm:$0xff]
    %v1059 = vld [vmem:[%s3 + $0x4d0] sm:$0xff]
    %v1060 = vld [vmem:[%s3 + $0x4d8] sm:$0xff]
    %v1061 = vld [vmem:[%s3 + $0x4e0] sm:$0xff]
    %v1062 = vld [vmem:[%s3 + $0x4e8] sm:$0xff]
    %v1063 = vld [vmem:[%s3 + $0x4f0] sm:$0xff]
    %v1064 = vld [vmem:[%s3 + $0x4f8] sm:$0xff]
    %v1065 = vld [vmem:[%s3 + $0x500] sm:$0xff]
    %v1066 = vld [vmem:[%s3 + $0x508] sm:$0xff]
    %v1067 = vld [vmem:[%s3 + $0x510] sm:$0xff]
    %v1068 = vld [vmem:[%s3 + $0x518] sm:$0xff]
    %v1069 = vld [vmem:[%s3 + $0x520] sm:$0xff]
    %v1070 = vld [vmem:[%s3 + $0x528] sm:$0xff]
    %v1071 = vld [vmem:[%s3 + $0x530] sm:$0xff]
    %v1072 = vld [vmem:[%s3 + $0x538] sm:$0xff]
    %v1073 = vld [vmem:[%s3 + $0x540] sm:$0xff]
    %v1074 = vld [vmem:[%s3 + $0x548] sm:$0xff]
    %v1075 = vld [vmem:[%s3 + $0x550] sm:$0xff]
    %v1076 = vld [vmem:[%s3 + $0x558] sm:$0xff]
    %v1077 = vld [vmem:[%s3 + $0x560] sm:$0xff]
    %v1078 = vld [vmem:[%s3 + $0x568] sm:$0xff]
    %v1079 = vld [vmem:[%s3 + $0x570] sm:$0xff]
    %v1080 = vld [vmem:[%s3 + $0x578] sm:$0xff]
    %v1081 = vld [vmem:[%s3 + $0x580] sm:$0xff]
    %v1082 = vld [vmem:[%s3 + $0x588] sm:$0xff]
    %v1083 = vld [vmem:[%s3 + $0x590] sm:$0xff]
    %v1084 = vld [vmem:[%s3 + $0x598] sm:$0xff]
    %v1085 = vld [vmem:[%s3 + $0x5a0] sm:$0xff]
    %v1086 = vld [vmem:[%s3 + $0x5a8] sm:$0xff]
    %v1087 = vld [vmem:[%s3 + $0x5b0] sm:$0xff]
    %v1088 = vld [vmem:[%s3 + $0x5b8] sm:$0xff]
    %v1089 = vld [vmem:[%s3 + $0x5c0] sm:$0xff]
    %v1090 = vld [vmem:[%s3 + $0x5c8] sm:$0xff]
    %v1091 = vld [vmem:[%s3 + $0x5d0] sm:$0xff]
    %v1092 = vld [vmem:[%s3 + $0x5d8] sm:$0xff]
    %v1093 = vld [vmem:[%s3 + $0x5e0] sm:$0xff]
    %v1094 = vld [vmem:[%s3 + $0x5e8] sm:$0xff]
    %v1095 = vld [vmem:[%s3 + $0x5f0] sm:$0xff]
    %v1096 = vld [vmem:[%s3 + $0x5f8] sm:$0xff]
    %v1097 = vld [vmem:[%s3 + $0x600] sm:$0xff]
    %v1098 = vld [vmem:[%s3 + $0x608] sm:$0xff]
    %v1099 = vld [vmem:[%s3 + $0x610] sm:$0xff]
    %v1100 = vld [vmem:[%s3 + $0x618] sm:$0xff]
    %v1101 = vld [vmem:[%s3 + $0x620] sm:$0xff]
    %v1102 = vld [vmem:[%s3 + $0x628] sm:$0xff]
    %v1103 = vld [vmem:[%s3 + $0x630] sm:$0xff]
    %v1104 = vld [vmem:[%s3 + $0x638] sm:$0xff]
    %v1105 = vld [vmem:[%s3 + $0x640] sm:$0xff]
    %v1106 = vld [vmem:[%s3 + $0x648] sm:$0xff]
    %v1107 = vld [vmem:[%s3 + $0x650] sm:$0xff]
    %v1108 = vld [vmem:[%s3 + $0x658] sm:$0xff]
    %v1109 = vld [vmem:[%s3 + $0x660] sm:$0xff]
    %v1110 = vld [vmem:[%s3 + $0x668] sm:$0xff]
    %v1111 = vld [vmem:[%s3 + $0x670] sm:$0xff]
    %v1112 = vld [vmem:[%s3 + $0x678] sm:$0xff]
    %v1113 = vld [vmem:[%s3 + $0x680] sm:$0xff]
    %v1114 = vld [vmem:[%s3 + $0x688] sm:$0xff]
    %v1115 = vld [vmem:[%s3 + $0x690] sm:$0xff]
    %v1116 = vld [vmem:[%s3 + $0x698] sm:$0xff]
    %v1117 = vld [vmem:[%s3 + $0x6a0] sm:$0xff]
    %v1118 = vld [vmem:[%s3 + $0x6a8] sm:$0xff]
    %v1119 = vld [vmem:[%s3 + $0x6b0] sm:$0xff]
    %v1120 = vld [vmem:[%s3 + $0x6b8] sm:$0xff]
    %v1121 = vld [vmem:[%s3 + $0x6c0] sm:$0xff]
    %v1122 = vld [vmem:[%s3 + $0x6c8] sm:$0xff]
    %v1123 = vld [vmem:[%s3 + $0x6d0] sm:$0xff]
    %v1124 = vld [vmem:[%s3 + $0x6d8] sm:$0xff]
    %v1125 = vld [vmem:[%s3 + $0x6e0] sm:$0xff]
    %v1126 = vld [vmem:[%s3 + $0x6e8] sm:$0xff]
    %v1127 = vld [vmem:[%s3 + $0x6f0] sm:$0xff]
    %v1128 = vld [vmem:[%s3 + $0x6f8] sm:$0xff]
    %v1129 = vld [vmem:[%s3 + $0x700] sm:$0xff]
    %v1130 = vld [vmem:[%s3 + $0x708] sm:$0xff]
    %v1131 = vld [vmem:[%s3 + $0x710] sm:$0xff]
    %v1132 = vld [vmem:[%s3 + $0x718] sm:$0xff]
    %v1133 = vld [vmem:[%s3 + $0x720] sm:$0xff]
    %v1134 = vld [vmem:[%s3 + $0x728] sm:$0xff]
    %v1135 = vld [vmem:[%s3 + $0x730] sm:$0xff]
    %v1136 = vld [vmem:[%s3 + $0x738] sm:$0xff]
    %v1137 = vld [vmem:[%s3 + $0x740] sm:$0xff]
    %v1138 = vld [vmem:[%s3 + $0x748] sm:$0xff]
    %v1139 = vld [vmem:[%s3 + $0x750] sm:$0xff]
    %v1140 = vld [vmem:[%s3 + $0x758] sm:$0xff]
    %v1141 = vld [vmem:[%s3 + $0x760] sm:$0xff]
    %v1142 = vld [vmem:[%s3 + $0x768] sm:$0xff]
    %v1143 = vld [vmem:[%s3 + $0x770] sm:$0xff]
    %v1144 = vld [vmem:[%s3 + $0x778] sm:$0xff]
    %v1145 = vld [vmem:[%s3 + $0x780] sm:$0xff]
    %v1146 = vld [vmem:[%s3 + $0x788] sm:$0xff]
    %v1147 = vld [vmem:[%s3 + $0x790] sm:$0xff]
    %v1148 = vld [vmem:[%s3 + $0x798] sm:$0xff]
    %v1149 = vld [vmem:[%s3 + $0x7a0] sm:$0xff]
    %v1150 = vld [vmem:[%s3 + $0x7a8] sm:$0xff]
    %v1151 = vld [vmem:[%s3 + $0x7b0] sm:$0xff]
    %v1152 = vld [vmem:[%s3 + $0x7b8] sm:$0xff]
    %v1153 = vld [vmem:[%s3 + $0x7c0] sm:$0xff]
    %v1154 = vld [vmem:[%s3 + $0x7c8] sm:$0xff]
    %v1155 = vld [vmem:[%s3 + $0x7d0] sm:$0xff]
    %v1156 = vld [vmem:[%s3 + $0x7d8] sm:$0xff]
    %v1157 = vld [vmem:[%s3 + $0x7e0] sm:$0xff]
    %v1158 = vld [vmem:[%s3 + $0x7e8] sm:$0xff]
    %v1159 = vld [vmem:[%s3 + $0x7f0] sm:$0xff]
    %v1160 = vld [vmem:[%s3 + $0x7f8] sm:$0xff]
    %1161 = vmatprep.subr.mxu0 0.0
    %1162 = vmatpush1.msra.mxu0 %v920
    %1163 = vmatprep.subr.mxu0 0.0
    %1164 = vmatpush1.msra.mxu0 %v919
    %1165 = vmatprep.subr.mxu0 0.0
    %1166 = vmatpush1.msra.mxu0 %v918
    %1167 = vmatprep.subr.mxu0 0.0
    %1168 = vmatpush1.msra.mxu0 %v917
    %1169 = vmatprep.subr.mxu0 0.0
    %1170 = vmatpush1.msra.mxu0 %v916
    %1171 = vmatprep.subr.mxu0 0.0
    %1172 = vmatpush1.msra.mxu0 %v915
    %1173 = vmatprep.subr.mxu0 0.0
    %1174 = vmatpush1.msra.mxu0 %v914
    %1175 = vmatprep.subr.mxu0 0.0
    %1176 = vmatpush1.msra.mxu0 %v913
    %1177 = vmatprep.subr.mxu0 0.0
    %1178 = vmatpush1.msra.mxu0 %v912
    %1179 = vmatprep.subr.mxu0 0.0
    %1180 = vmatpush1.msra.mxu0 %v911
    %1181 = vmatprep.subr.mxu0 0.0
    %1182 = vmatpush1.msra.mxu0 %v910
    %1183 = vmatprep.subr.mxu0 0.0
    %1184 = vmatpush1.msra.mxu0 %v909
    %1185 = vmatprep.subr.mxu0 0.0
    %1186 = vmatpush1.msra.mxu0 %v908
    %1187 = vmatprep.subr.mxu0 0.0
    %1188 = vmatpush1.msra.mxu0 %v907
    %1189 = vmatprep.subr.mxu0 0.0
    %1190 = vmatpush1.msra.mxu0 %v906
    %1191 = vmatprep.subr.mxu0 0.0
    %1192 = vmatpush1.msra.mxu0 %v905
    %1193 = vmatprep.subr.mxu0 0.0
    %1194 = vmatpush2.msra.mxu0 %v936
    %1195 = vmatprep.subr.mxu0 0.0
    %1196 = vmatpush2.msra.mxu0 %v935
    %1197 = vmatprep.subr.mxu0 0.0
    %1198 = vmatpush2.msra.mxu0 %v934
    %1199 = vmatprep.subr.mxu0 0.0
    %1200 = vmatpush2.msra.mxu0 %v933
    %1201 = vmatprep.subr.mxu0 0.0
    %1202 = vmatpush2.msra.mxu0 %v932
    %1203 = vmatprep.subr.mxu0 0.0
    %1204 = vmatpush2.msra.mxu0 %v931
    %1205 = vmatprep.subr.mxu0 0.0
    %1206 = vmatpush2.msra.mxu0 %v930
    %1207 = vmatprep.subr.mxu0 0.0
    %1208 = vmatpush2.msra.mxu0 %v929
    %1209 = vmatprep.subr.mxu0 0.0
    %1210 = vmatpush2.msra.mxu0 %v928
    %1211 = vmatprep.subr.mxu0 0.0
    %1212 = vmatpush2.msra.mxu0 %v927
    %1213 = vmatprep.subr.mxu0 0.0
    %1214 = vmatpush2.msra.mxu0 %v926
    %1215 = vmatprep.subr.mxu0 0.0
    %1216 = vmatpush2.msra.mxu0 %v925
    %1217 = vmatprep.subr.mxu0 0.0
    %1218 = vmatpush2.msra.mxu0 %v924
    %1219 = vmatprep.subr.mxu0 0.0
    %1220 = vmatpush2.msra.mxu0 %v923
    %1221 = vmatprep.subr.mxu0 0.0
    %1222 = vmatpush2.msra.mxu0 %v922
    %1223 = vmatprep.subr.mxu0 0.0
    %1224 = vmatpush2.msra.mxu0 %v921
    %1225 = vmatprep.mubr.f32.mxu0 %v842
    %1226 = vmatmul.mubr.f32.gmra.mxu0 %v841
    %v1227 = vpop.f32.mrf.mxu0
    %v1228 = vadd.f32 0.0, %v1227
    %v1229 = vpop.f32.mrf.mxu0
    %1230 = vmatprep.mubr.f32.mxu0 %v858
    %1231 = vmatmul.mubr.f32.gmra.mxu0 %v857
    %v1232 = vpop.f32.mrf.mxu0
    %v1233 = vadd.f32 0.0, %v1232
    %v1234 = vpop.f32.mrf.mxu0
    %1235 = vmatprep.mubr.f32.mxu0 %v874
    %1236 = vmatmul.mubr.f32.gmra.mxu0 %v873
    %v1237 = vpop.f32.mrf.mxu0
    %v1238 = vadd.f32 0.0, %v1237
    %v1239 = vpop.f32.mrf.mxu0
    %1240 = vmatprep.mubr.f32.mxu0 %v890
    %1241 = vmatmul.mubr.f32.gmra.mxu0 %v889
    %v1242 = vpop.f32.mrf.mxu0
    %v1243 = vadd.f32 0.0, %v1242
    %v1244 = vpop.f32.mrf.mxu0
    %1245 = vdwg.mxu0
    %1246 = vmatprep.subr.mxu0 0.0
    %1247 = vmatpush1.msra.mxu0 %v952
    %1248 = vmatprep.subr.mxu0 0.0
    %1249 = vmatpush1.msra.mxu0 %v951
    %1250 = vmatprep.subr.mxu0 0.0
    %1251 = vmatpush1.msra.mxu0 %v950
    %1252 = vmatprep.subr.mxu0 0.0
    %1253 = vmatpush1.msra.mxu0 %v949
    %1254 = vmatprep.subr.mxu0 0.0
    %1255 = vmatpush1.msra.mxu0 %v948
    %1256 = vmatprep.subr.mxu0 0.0
    %1257 = vmatpush1.msra.mxu0 %v947
    %1258 = vmatprep.subr.mxu0 0.0
    %1259 = vmatpush1.msra.mxu0 %v946
    %1260 = vmatprep.subr.mxu0 0.0
    %1261 = vmatpush1.msra.mxu0 %v945
    %1262 = vmatprep.subr.mxu0 0.0
    %1263 = vmatpush1.msra.mxu0 %v944
    %1264 = vmatprep.subr.mxu0 0.0
    %1265 = vmatpush1.msra.mxu0 %v943
    %1266 = vmatprep.subr.mxu0 0.0
    %1267 = vmatpush1.msra.mxu0 %v942
    %1268 = vmatprep.subr.mxu0 0.0
    %1269 = vmatpush1.msra.mxu0 %v941
    %1270 = vmatprep.subr.mxu0 0.0
    %1271 = vmatpush1.msra.mxu0 %v940
    %1272 = vmatprep.subr.mxu0 0.0
    %1273 = vmatpush1.msra.mxu0 %v939
    %1274 = vmatprep.subr.mxu0 0.0
    %1275 = vmatpush1.msra.mxu0 %v938
    %1276 = vmatprep.subr.mxu0 0.0
    %1277 = vmatpush1.msra.mxu0 %v937
    %1278 = vmatprep.subr.mxu0 0.0
    %1279 = vmatpush2.msra.mxu0 %v968
    %1280 = vmatprep.subr.mxu0 0.0
    %1281 = vmatpush2.msra.mxu0 %v967
    %1282 = vmatprep.subr.mxu0 0.0
    %1283 = vmatpush2.msra.mxu0 %v966
    %1284 = vmatprep.subr.mxu0 0.0
    %1285 = vmatpush2.msra.mxu0 %v965
    %1286 = vmatprep.subr.mxu0 0.0
    %1287 = vmatpush2.msra.mxu0 %v964
    %1288 = vmatprep.subr.mxu0 0.0
    %1289 = vmatpush2.msra.mxu0 %v963
    %1290 = vmatprep.subr.mxu0 0.0
    %1291 = vmatpush2.msra.mxu0 %v962
    %1292 = vmatprep.subr.mxu0 0.0
    %1293 = vmatpush2.msra.mxu0 %v961
    %1294 = vmatprep.subr.mxu0 0.0
    %1295 = vmatpush2.msra.mxu0 %v960
    %1296 = vmatprep.subr.mxu0 0.0
    %1297 = vmatpush2.msra.mxu0 %v959
    %1298 = vmatprep.subr.mxu0 0.0
    %1299 = vmatpush2.msra.mxu0 %v958
    %1300 = vmatprep.subr.mxu0 0.0
    %1301 = vmatpush2.msra.mxu0 %v957
    %1302 = vmatprep.subr.mxu0 0.0
    %1303 = vmatpush2.msra.mxu0 %v956
    %1304 = vmatprep.subr.mxu0 0.0
    %1305 = vmatpush2.msra.mxu0 %v955
    %1306 = vmatprep.subr.mxu0 0.0
    %1307 = vmatpush2.msra.mxu0 %v954
    %1308 = vmatprep.subr.mxu0 0.0
    %1309 = vmatpush2.msra.mxu0 %v953
    %1310 = vmatprep.mubr.f32.mxu0 %v844
    %1311 = vmatmul.mubr.f32.gmra.mxu0 %v843
    %v1312 = vpop.f32.mrf.mxu0
    %v1313 = vadd.f32 %v1228, %v1312
    %v1314 = vpop.f32.mrf.mxu0
    %1315 = vmatprep.mubr.f32.mxu0 %v860
    %1316 = vmatmul.mubr.f32.gmra.mxu0 %v859
    %v1317 = vpop.f32.mrf.mxu0
    %v1318 = vadd.f32 %v1233, %v1317
    %v1319 = vpop.f32.mrf.mxu0
    %1320 = vmatprep.mubr.f32.mxu0 %v876
    %1321 = vmatmul.mubr.f32.gmra.mxu0 %v875
    %v1322 = vpop.f32.mrf.mxu0
    %v1323 = vadd.f32 %v1238, %v1322
    %v1324 = vpop.f32.mrf.mxu0
    %1325 = vmatprep.mubr.f32.mxu0 %v892
    %1326 = vmatmul.mubr.f32.gmra.mxu0 %v891
    %v1327 = vpop.f32.mrf.mxu0
    %v1328 = vadd.f32 %v1243, %v1327
    %v1329 = vpop.f32.mrf.mxu0
    %1330 = vdwg.mxu0
    %1331 = vmatprep.subr.mxu0 0.0
    %1332 = vmatpush1.msra.mxu0 %v984
    %1333 = vmatprep.subr.mxu0 0.0
    %1334 = vmatpush1.msra.mxu0 %v983
    %1335 = vmatprep.subr.mxu0 0.0
    %1336 = vmatpush1.msra.mxu0 %v982
    %1337 = vmatprep.subr.mxu0 0.0
    %1338 = vmatpush1.msra.mxu0 %v981
    %1339 = vmatprep.subr.mxu0 0.0
    %1340 = vmatpush1.msra.mxu0 %v980
    %1341 = vmatprep.subr.mxu0 0.0
    %1342 = vmatpush1.msra.mxu0 %v979
    %1343 = vmatprep.subr.mxu0 0.0
    %1344 = vmatpush1.msra.mxu0 %v978
    %1345 = vmatprep.subr.mxu0 0.0
    %1346 = vmatpush1.msra.mxu0 %v977
    %1347 = vmatprep.subr.mxu0 0.0
    %1348 = vmatpush1.msra.mxu0 %v976
    %1349 = vmatprep.subr.mxu0 0.0
    %1350 = vmatpush1.msra.mxu0 %v975
    %1351 = vmatprep.subr.mxu0 0.0
    %1352 = vmatpush1.msra.mxu0 %v974
    %1353 = vmatprep.subr.mxu0 0.0
    %1354 = vmatpush1.msra.mxu0 %v973
    %1355 = vmatprep.subr.mxu0 0.0
    %1356 = vmatpush1.msra.mxu0 %v972
    %1357 = vmatprep.subr.mxu0 0.0
    %1358 = vmatpush1.msra.mxu0 %v971
    %1359 = vmatprep.subr.mxu0 0.0
    %1360 = vmatpush1.msra.mxu0 %v970
    %1361 = vmatprep.subr.mxu0 0.0
    %1362 = vmatpush1.msra.mxu0 %v969
    %1363 = vmatprep.subr.mxu0 0.0
    %1364 = vmatpush2.msra.mxu0 %v1000
    %1365 = vmatprep.subr.mxu0 0.0
    %1366 = vmatpush2.msra.mxu0 %v999
    %1367 = vmatprep.subr.mxu0 0.0
    %1368 = vmatpush2.msra.mxu0 %v998
    %1369 = vmatprep.subr.mxu0 0.0
    %1370 = vmatpush2.msra.mxu0 %v997
    %1371 = vmatprep.subr.mxu0 0.0
    %1372 = vmatpush2.msra.mxu0 %v996
    %1373 = vmatprep.subr.mxu0 0.0
    %1374 = vmatpush2.msra.mxu0 %v995
    %1375 = vmatprep.subr.mxu0 0.0
    %1376 = vmatpush2.msra.mxu0 %v994
    %1377 = vmatprep.subr.mxu0 0.0
    %1378 = vmatpush2.msra.mxu0 %v993
    %1379 = vmatprep.subr.mxu0 0.0
    %1380 = vmatpush2.msra.mxu0 %v992
    %1381 = vmatprep.subr.mxu0 0.0
    %1382 = vmatpush2.msra.mxu0 %v991
    %1383 = vmatprep.subr.mxu0 0.0
    %1384 = vmatpush2.msra.mxu0 %v990
    %1385 = vmatprep.subr.mxu0 0.0
    %1386 = vmatpush2.msra.mxu0 %v989
    %1387 = vmatprep.subr.mxu0 0.0
    %1388 = vmatpush2.msra.mxu0 %v988
    %1389 = vmatprep.subr.mxu0 0.0
    %1390 = vmatpush2.msra.mxu0 %v987
    %1391 = vmatprep.subr.mxu0 0.0
    %1392 = vmatpush2.msra.mxu0 %v986
    %1393 = vmatprep.subr.mxu0 0.0
    %1394 = vmatpush2.msra.mxu0 %v985
    %1395 = vmatprep.mubr.f32.mxu0 %v846
    %1396 = vmatmul.mubr.f32.gmra.mxu0 %v845
    %v1397 = vpop.f32.mrf.mxu0
    %v1398 = vadd.f32 %v1313, %v1397
    %v1399 = vpop.f32.mrf.mxu0
    %1400 = vmatprep.mubr.f32.mxu0 %v862
    %1401 = vmatmul.mubr.f32.gmra.mxu0 %v861
    %v1402 = vpop.f32.mrf.mxu0
    %v1403 = vadd.f32 %v1318, %v1402
    %v1404 = vpop.f32.mrf.mxu0
    %1405 = vmatprep.mubr.f32.mxu0 %v878
    %1406 = vmatmul.mubr.f32.gmra.mxu0 %v877
    %v1407 = vpop.f32.mrf.mxu0
    %v1408 = vadd.f32 %v1323, %v1407
    %v1409 = vpop.f32.mrf.mxu0
    %1410 = vmatprep.mubr.f32.mxu0 %v894
    %1411 = vmatmul.mubr.f32.gmra.mxu0 %v893
    %v1412 = vpop.f32.mrf.mxu0
    %v1413 = vadd.f32 %v1328, %v1412
    %v1414 = vpop.f32.mrf.mxu0
    %1415 = vdwg.mxu0
    %1416 = vmatprep.subr.mxu0 0.0
    %1417 = vmatpush1.msra.mxu0 %v1016
    %1418 = vmatprep.subr.mxu0 0.0
    %1419 = vmatpush1.msra.mxu0 %v1015
    %1420 = vmatprep.subr.mxu0 0.0
    %1421 = vmatpush1.msra.mxu0 %v1014
    %1422 = vmatprep.subr.mxu0 0.0
    %1423 = vmatpush1.msra.mxu0 %v1013
    %1424 = vmatprep.subr.mxu0 0.0
    %1425 = vmatpush1.msra.mxu0 %v1012
    %1426 = vmatprep.subr.mxu0 0.0
    %1427 = vmatpush1.msra.mxu0 %v1011
    %1428 = vmatprep.subr.mxu0 0.0
    %1429 = vmatpush1.msra.mxu0 %v1010
    %1430 = vmatprep.subr.mxu0 0.0
    %1431 = vmatpush1.msra.mxu0 %v1009
    %1432 = vmatprep.subr.mxu0 0.0
    %1433 = vmatpush1.msra.mxu0 %v1008
    %1434 = vmatprep.subr.mxu0 0.0
    %1435 = vmatpush1.msra.mxu0 %v1007
    %1436 = vmatprep.subr.mxu0 0.0
    %1437 = vmatpush1.msra.mxu0 %v1006
    %1438 = vmatprep.subr.mxu0 0.0
    %1439 = vmatpush1.msra.mxu0 %v1005
    %1440 = vmatprep.subr.mxu0 0.0
    %1441 = vmatpush1.msra.mxu0 %v1004
    %1442 = vmatprep.subr.mxu0 0.0
    %1443 = vmatpush1.msra.mxu0 %v1003
    %1444 = vmatprep.subr.mxu0 0.0
    %1445 = vmatpush1.msra.mxu0 %v1002
    %1446 = vmatprep.subr.mxu0 0.0
    %1447 = vmatpush1.msra.mxu0 %v1001
    %1448 = vmatprep.subr.mxu0 0.0
    %1449 = vmatpush2.msra.mxu0 %v1032
    %1450 = vmatprep.subr.mxu0 0.0
    %1451 = vmatpush2.msra.mxu0 %v1031
    %1452 = vmatprep.subr.mxu0 0.0
    %1453 = vmatpush2.msra.mxu0 %v1030
    %1454 = vmatprep.subr.mxu0 0.0
    %1455 = vmatpush2.msra.mxu0 %v1029
    %1456 = vmatprep.subr.mxu0 0.0
    %1457 = vmatpush2.msra.mxu0 %v1028
    %1458 = vmatprep.subr.mxu0 0.0
    %1459 = vmatpush2.msra.mxu0 %v1027
    %1460 = vmatprep.subr.mxu0 0.0
    %1461 = vmatpush2.msra.mxu0 %v1026
    %1462 = vmatprep.subr.mxu0 0.0
    %1463 = vmatpush2.msra.mxu0 %v1025
    %1464 = vmatprep.subr.mxu0 0.0
    %1465 = vmatpush2.msra.mxu0 %v1024
    %1466 = vmatprep.subr.mxu0 0.0
    %1467 = vmatpush2.msra.mxu0 %v1023
    %1468 = vmatprep.subr.mxu0 0.0
    %1469 = vmatpush2.msra.mxu0 %v1022
    %1470 = vmatprep.subr.mxu0 0.0
    %1471 = vmatpush2.msra.mxu0 %v1021
    %1472 = vmatprep.subr.mxu0 0.0
    %1473 = vmatpush2.msra.mxu0 %v1020
    %1474 = vmatprep.subr.mxu0 0.0
    %1475 = vmatpush2.msra.mxu0 %v1019
    %1476 = vmatprep.subr.mxu0 0.0
    %1477 = vmatpush2.msra.mxu0 %v1018
    %1478 = vmatprep.subr.mxu0 0.0
    %1479 = vmatpush2.msra.mxu0 %v1017
    %1480 = vmatprep.mubr.f32.mxu0 %v848
    %1481 = vmatmul.mubr.f32.gmra.mxu0 %v847
    %v1482 = vpop.f32.mrf.mxu0
    %v1483 = vadd.f32 %v1398, %v1482
    %v1484 = vpop.f32.mrf.mxu0
    %1485 = vmatprep.mubr.f32.mxu0 %v864
    %1486 = vmatmul.mubr.f32.gmra.mxu0 %v863
    %v1487 = vpop.f32.mrf.mxu0
    %v1488 = vadd.f32 %v1403, %v1487
    %v1489 = vpop.f32.mrf.mxu0
    %1490 = vmatprep.mubr.f32.mxu0 %v880
    %1491 = vmatmul.mubr.f32.gmra.mxu0 %v879
    %v1492 = vpop.f32.mrf.mxu0
    %v1493 = vadd.f32 %v1408, %v1492
    %v1494 = vpop.f32.mrf.mxu0
    %1495 = vmatprep.mubr.f32.mxu0 %v896
    %1496 = vmatmul.mubr.f32.gmra.mxu0 %v895
    %v1497 = vpop.f32.mrf.mxu0
    %v1498 = vadd.f32 %v1413, %v1497
    %v1499 = vpop.f32.mrf.mxu0
    %1500 = vdwg.mxu0
    %1501 = vmatprep.subr.mxu0 0.0
    %1502 = vmatpush1.msra.mxu0 %v1048
    %1503 = vmatprep.subr.mxu0 0.0
    %1504 = vmatpush1.msra.mxu0 %v1047
    %1505 = vmatprep.subr.mxu0 0.0
    %1506 = vmatpush1.msra.mxu0 %v1046
    %1507 = vmatprep.subr.mxu0 0.0
    %1508 = vmatpush1.msra.mxu0 %v1045
    %1509 = vmatprep.subr.mxu0 0.0
    %1510 = vmatpush1.msra.mxu0 %v1044
    %1511 = vmatprep.subr.mxu0 0.0
    %1512 = vmatpush1.msra.mxu0 %v1043
    %1513 = vmatprep.subr.mxu0 0.0
    %1514 = vmatpush1.msra.mxu0 %v1042
    %1515 = vmatprep.subr.mxu0 0.0
    %1516 = vmatpush1.msra.mxu0 %v1041
    %1517 = vmatprep.subr.mxu0 0.0
    %1518 = vmatpush1.msra.mxu0 %v1040
    %1519 = vmatprep.subr.mxu0 0.0
    %1520 = vmatpush1.msra.mxu0 %v1039
    %1521 = vmatprep.subr.mxu0 0.0
    %1522 = vmatpush1.msra.mxu0 %v1038
    %1523 = vmatprep.subr.mxu0 0.0
    %1524 = vmatpush1.msra.mxu0 %v1037
    %1525 = vmatprep.subr.mxu0 0.0
    %1526 = vmatpush1.msra.mxu0 %v1036
    %1527 = vmatprep.subr.mxu0 0.0
    %1528 = vmatpush1.msra.mxu0 %v1035
    %1529 = vmatprep.subr.mxu0 0.0
    %1530 = vmatpush1.msra.mxu0 %v1034
    %1531 = vmatprep.subr.mxu0 0.0
    %1532 = vmatpush1.msra.mxu0 %v1033
    %1533 = vmatprep.subr.mxu0 0.0
    %1534 = vmatpush2.msra.mxu0 %v1064
    %1535 = vmatprep.subr.mxu0 0.0
    %1536 = vmatpush2.msra.mxu0 %v1063
    %1537 = vmatprep.subr.mxu0 0.0
    %1538 = vmatpush2.msra.mxu0 %v1062
    %1539 = vmatprep.subr.mxu0 0.0
    %1540 = vmatpush2.msra.mxu0 %v1061
    %1541 = vmatprep.subr.mxu0 0.0
    %1542 = vmatpush2.msra.mxu0 %v1060
    %1543 = vmatprep.subr.mxu0 0.0
    %1544 = vmatpush2.msra.mxu0 %v1059
    %1545 = vmatprep.subr.mxu0 0.0
    %1546 = vmatpush2.msra.mxu0 %v1058
    %1547 = vmatprep.subr.mxu0 0.0
    %1548 = vmatpush2.msra.mxu0 %v1057
    %1549 = vmatprep.subr.mxu0 0.0
    %1550 = vmatpush2.msra.mxu0 %v1056
    %1551 = vmatprep.subr.mxu0 0.0
    %1552 = vmatpush2.msra.mxu0 %v1055
    %1553 = vmatprep.subr.mxu0 0.0
    %1554 = vmatpush2.msra.mxu0 %v1054
    %1555 = vmatprep.subr.mxu0 0.0
    %1556 = vmatpush2.msra.mxu0 %v1053
    %1557 = vmatprep.subr.mxu0 0.0
    %1558 = vmatpush2.msra.mxu0 %v1052
    %1559 = vmatprep.subr.mxu0 0.0
    %1560 = vmatpush2.msra.mxu0 %v1051
    %1561 = vmatprep.subr.mxu0 0.0
    %1562 = vmatpush2.msra.mxu0 %v1050
    %1563 = vmatprep.subr.mxu0 0.0
    %1564 = vmatpush2.msra.mxu0 %v1049
    %1565 = vmatprep.mubr.f32.mxu0 %v850
    %1566 = vmatmul.mubr.f32.gmra.mxu0 %v849
    %v1567 = vpop.f32.mrf.mxu0
    %v1568 = vadd.f32 %v1483, %v1567
    %v1569 = vpop.f32.mrf.mxu0
    %1570 = vmatprep.mubr.f32.mxu0 %v866
    %1571 = vmatmul.mubr.f32.gmra.mxu0 %v865
    %v1572 = vpop.f32.mrf.mxu0
    %v1573 = vadd.f32 %v1488, %v1572
    %v1574 = vpop.f32.mrf.mxu0
    %1575 = vmatprep.mubr.f32.mxu0 %v882
    %1576 = vmatmul.mubr.f32.gmra.mxu0 %v881
    %v1577 = vpop.f32.mrf.mxu0
    %v1578 = vadd.f32 %v1493, %v1577
    %v1579 = vpop.f32.mrf.mxu0
    %1580 = vmatprep.mubr.f32.mxu0 %v898
    %1581 = vmatmul.mubr.f32.gmra.mxu0 %v897
    %v1582 = vpop.f32.mrf.mxu0
    %v1583 = vadd.f32 %v1498, %v1582
    %v1584 = vpop.f32.mrf.mxu0
    %1585 = vdwg.mxu0
    %1586 = vmatprep.subr.mxu0 0.0
    %1587 = vmatpush1.msra.mxu0 %v1080
    %1588 = vmatprep.subr.mxu0 0.0
    %1589 = vmatpush1.msra.mxu0 %v1079
    %1590 = vmatprep.subr.mxu0 0.0
    %1591 = vmatpush1.msra.mxu0 %v1078
    %1592 = vmatprep.subr.mxu0 0.0
    %1593 = vmatpush1.msra.mxu0 %v1077
    %1594 = vmatprep.subr.mxu0 0.0
    %1595 = vmatpush1.msra.mxu0 %v1076
    %1596 = vmatprep.subr.mxu0 0.0
    %1597 = vmatpush1.msra.mxu0 %v1075
    %1598 = vmatprep.subr.mxu0 0.0
    %1599 = vmatpush1.msra.mxu0 %v1074
    %1600 = vmatprep.subr.mxu0 0.0
    %1601 = vmatpush1.msra.mxu0 %v1073
    %1602 = vmatprep.subr.mxu0 0.0
    %1603 = vmatpush1.msra.mxu0 %v1072
    %1604 = vmatprep.subr.mxu0 0.0
    %1605 = vmatpush1.msra.mxu0 %v1071
    %1606 = vmatprep.subr.mxu0 0.0
    %1607 = vmatpush1.msra.mxu0 %v1070
    %1608 = vmatprep.subr.mxu0 0.0
    %1609 = vmatpush1.msra.mxu0 %v1069
    %1610 = vmatprep.subr.mxu0 0.0
    %1611 = vmatpush1.msra.mxu0 %v1068
    %1612 = vmatprep.subr.mxu0 0.0
    %1613 = vmatpush1.msra.mxu0 %v1067
    %1614 = vmatprep.subr.mxu0 0.0
    %1615 = vmatpush1.msra.mxu0 %v1066
    %1616 = vmatprep.subr.mxu0 0.0
    %1617 = vmatpush1.msra.mxu0 %v1065
    %1618 = vmatprep.subr.mxu0 0.0
    %1619 = vmatpush2.msra.mxu0 %v1096
    %1620 = vmatprep.subr.mxu0 0.0
    %1621 = vmatpush2.msra.mxu0 %v1095
    %1622 = vmatprep.subr.mxu0 0.0
    %1623 = vmatpush2.msra.mxu0 %v1094
    %1624 = vmatprep.subr.mxu0 0.0
    %1625 = vmatpush2.msra.mxu0 %v1093
    %1626 = vmatprep.subr.mxu0 0.0
    %1627 = vmatpush2.msra.mxu0 %v1092
    %1628 = vmatprep.subr.mxu0 0.0
    %1629 = vmatpush2.msra.mxu0 %v1091
    %1630 = vmatprep.subr.mxu0 0.0
    %1631 = vmatpush2.msra.mxu0 %v1090
    %1632 = vmatprep.subr.mxu0 0.0
    %1633 = vmatpush2.msra.mxu0 %v1089
    %1634 = vmatprep.subr.mxu0 0.0
    %1635 = vmatpush2.msra.mxu0 %v1088
    %1636 = vmatprep.subr.mxu0 0.0
    %1637 = vmatpush2.msra.mxu0 %v1087
    %1638 = vmatprep.subr.mxu0 0.0
    %1639 = vmatpush2.msra.mxu0 %v1086
    %1640 = vmatprep.subr.mxu0 0.0
    %1641 = vmatpush2.msra.mxu0 %v1085
    %1642 = vmatprep.subr.mxu0 0.0
    %1643 = vmatpush2.msra.mxu0 %v1084
    %1644 = vmatprep.subr.mxu0 0.0
    %1645 = vmatpush2.msra.mxu0 %v1083
    %1646 = vmatprep.subr.mxu0 0.0
    %1647 = vmatpush2.msra.mxu0 %v1082
    %1648 = vmatprep.subr.mxu0 0.0
    %1649 = vmatpush2.msra.mxu0 %v1081
    %1650 = vmatprep.mubr.f32.mxu0 %v852
    %1651 = vmatmul.mubr.f32.gmra.mxu0 %v851
    %v1652 = vpop.f32.mrf.mxu0
    %v1653 = vadd.f32 %v1568, %v1652
    %v1654 = vpop.f32.mrf.mxu0
    %1655 = vmatprep.mubr.f32.mxu0 %v868
    %1656 = vmatmul.mubr.f32.gmra.mxu0 %v867
    %v1657 = vpop.f32.mrf.mxu0
    %v1658 = vadd.f32 %v1573, %v1657
    %v1659 = vpop.f32.mrf.mxu0
    %1660 = vmatprep.mubr.f32.mxu0 %v884
    %1661 = vmatmul.mubr.f32.gmra.mxu0 %v883
    %v1662 = vpop.f32.mrf.mxu0
    %v1663 = vadd.f32 %v1578, %v1662
    %v1664 = vpop.f32.mrf.mxu0
    %1665 = vmatprep.mubr.f32.mxu0 %v900
    %1666 = vmatmul.mubr.f32.gmra.mxu0 %v899
    %v1667 = vpop.f32.mrf.mxu0
    %v1668 = vadd.f32 %v1583, %v1667
    %v1669 = vpop.f32.mrf.mxu0
    %1670 = vdwg.mxu0
    %1671 = vmatprep.subr.mxu0 0.0
    %1672 = vmatpush1.msra.mxu0 %v1112
    %1673 = vmatprep.subr.mxu0 0.0
    %1674 = vmatpush1.msra.mxu0 %v1111
    %1675 = vmatprep.subr.mxu0 0.0
    %1676 = vmatpush1.msra.mxu0 %v1110
    %1677 = vmatprep.subr.mxu0 0.0
    %1678 = vmatpush1.msra.mxu0 %v1109
    %1679 = vmatprep.subr.mxu0 0.0
    %1680 = vmatpush1.msra.mxu0 %v1108
    %1681 = vmatprep.subr.mxu0 0.0
    %1682 = vmatpush1.msra.mxu0 %v1107
    %1683 = vmatprep.subr.mxu0 0.0
    %1684 = vmatpush1.msra.mxu0 %v1106
    %1685 = vmatprep.subr.mxu0 0.0
    %1686 = vmatpush1.msra.mxu0 %v1105
    %1687 = vmatprep.subr.mxu0 0.0
    %1688 = vmatpush1.msra.mxu0 %v1104
    %1689 = vmatprep.subr.mxu0 0.0
    %1690 = vmatpush1.msra.mxu0 %v1103
    %1691 = vmatprep.subr.mxu0 0.0
    %1692 = vmatpush1.msra.mxu0 %v1102
    %1693 = vmatprep.subr.mxu0 0.0
    %1694 = vmatpush1.msra.mxu0 %v1101
    %1695 = vmatprep.subr.mxu0 0.0
    %1696 = vmatpush1.msra.mxu0 %v1100
    %1697 = vmatprep.subr.mxu0 0.0
    %1698 = vmatpush1.msra.mxu0 %v1099
    %1699 = vmatprep.subr.mxu0 0.0
    %1700 = vmatpush1.msra.mxu0 %v1098
    %1701 = vmatprep.subr.mxu0 0.0
    %1702 = vmatpush1.msra.mxu0 %v1097
    %1703 = vmatprep.subr.mxu0 0.0
    %1704 = vmatpush2.msra.mxu0 %v1128
    %1705 = vmatprep.subr.mxu0 0.0
    %1706 = vmatpush2.msra.mxu0 %v1127
    %1707 = vmatprep.subr.mxu0 0.0
    %1708 = vmatpush2.msra.mxu0 %v1126
    %1709 = vmatprep.subr.mxu0 0.0
    %1710 = vmatpush2.msra.mxu0 %v1125
    %1711 = vmatprep.subr.mxu0 0.0
    %1712 = vmatpush2.msra.mxu0 %v1124
    %1713 = vmatprep.subr.mxu0 0.0
    %1714 = vmatpush2.msra.mxu0 %v1123
    %1715 = vmatprep.subr.mxu0 0.0
    %1716 = vmatpush2.msra.mxu0 %v1122
    %1717 = vmatprep.subr.mxu0 0.0
    %1718 = vmatpush2.msra.mxu0 %v1121
    %1719 = vmatprep.subr.mxu0 0.0
    %1720 = vmatpush2.msra.mxu0 %v1120
    %1721 = vmatprep.subr.mxu0 0.0
    %1722 = vmatpush2.msra.mxu0 %v1119
    %1723 = vmatprep.subr.mxu0 0.0
    %1724 = vmatpush2.msra.mxu0 %v1118
    %1725 = vmatprep.subr.mxu0 0.0
    %1726 = vmatpush2.msra.mxu0 %v1117
    %1727 = vmatprep.subr.mxu0 0.0
    %1728 = vmatpush2.msra.mxu0 %v1116
    %1729 = vmatprep.subr.mxu0 0.0
    %1730 = vmatpush2.msra.mxu0 %v1115
    %1731 = vmatprep.subr.mxu0 0.0
    %1732 = vmatpush2.msra.mxu0 %v1114
    %1733 = vmatprep.subr.mxu0 0.0
    %1734 = vmatpush2.msra.mxu0 %v1113
    %1735 = vmatprep.mubr.f32.mxu0 %v854
    %1736 = vmatmul.mubr.f32.gmra.mxu0 %v853
    %v1737 = vpop.f32.mrf.mxu0
    %v1738 = vadd.f32 %v1653, %v1737
    %v1739 = vpop.f32.mrf.mxu0
    %1740 = vmatprep.mubr.f32.mxu0 %v870
    %1741 = vmatmul.mubr.f32.gmra.mxu0 %v869
    %v1742 = vpop.f32.mrf.mxu0
    %v1743 = vadd.f32 %v1658, %v1742
    %v1744 = vpop.f32.mrf.mxu0
    %1745 = vmatprep.mubr.f32.mxu0 %v886
    %1746 = vmatmul.mubr.f32.gmra.mxu0 %v885
    %v1747 = vpop.f32.mrf.mxu0
    %v1748 = vadd.f32 %v1663, %v1747
    %v1749 = vpop.f32.mrf.mxu0
    %1750 = vmatprep.mubr.f32.mxu0 %v902
    %1751 = vmatmul.mubr.f32.gmra.mxu0 %v901
    %v1752 = vpop.f32.mrf.mxu0
    %v1753 = vadd.f32 %v1668, %v1752
    %v1754 = vpop.f32.mrf.mxu0
    %1755 = vdwg.mxu0
    %1756 = vmatprep.subr.mxu0 0.0
    %1757 = vmatpush1.msra.mxu0 %v1144
    %1758 = vmatprep.subr.mxu0 0.0
    %1759 = vmatpush1.msra.mxu0 %v1143
    %1760 = vmatprep.subr.mxu0 0.0
    %1761 = vmatpush1.msra.mxu0 %v1142
    %1762 = vmatprep.subr.mxu0 0.0
    %1763 = vmatpush1.msra.mxu0 %v1141
    %1764 = vmatprep.subr.mxu0 0.0
    %1765 = vmatpush1.msra.mxu0 %v1140
    %1766 = vmatprep.subr.mxu0 0.0
    %1767 = vmatpush1.msra.mxu0 %v1139
    %1768 = vmatprep.subr.mxu0 0.0
    %1769 = vmatpush1.msra.mxu0 %v1138
    %1770 = vmatprep.subr.mxu0 0.0
    %1771 = vmatpush1.msra.mxu0 %v1137
    %1772 = vmatprep.subr.mxu0 0.0
    %1773 = vmatpush1.msra.mxu0 %v1136
    %1774 = vmatprep.subr.mxu0 0.0
    %1775 = vmatpush1.msra.mxu0 %v1135
    %1776 = vmatprep.subr.mxu0 0.0
    %1777 = vmatpush1.msra.mxu0 %v1134
    %1778 = vmatprep.subr.mxu0 0.0
    %1779 = vmatpush1.msra.mxu0 %v1133
    %1780 = vmatprep.subr.mxu0 0.0
    %1781 = vmatpush1.msra.mxu0 %v1132
    %1782 = vmatprep.subr.mxu0 0.0
    %1783 = vmatpush1.msra.mxu0 %v1131
    %1784 = vmatprep.subr.mxu0 0.0
    %1785 = vmatpush1.msra.mxu0 %v1130
    %1786 = vmatprep.subr.mxu0 0.0
    %1787 = vmatpush1.msra.mxu0 %v1129
    %1788 = vmatprep.subr.mxu0 0.0
    %1789 = vmatpush2.msra.mxu0 %v1160
    %1790 = vmatprep.subr.mxu0 0.0
    %1791 = vmatpush2.msra.mxu0 %v1159
    %1792 = vmatprep.subr.mxu0 0.0
    %1793 = vmatpush2.msra.mxu0 %v1158
    %1794 = vmatprep.subr.mxu0 0.0
    %1795 = vmatpush2.msra.mxu0 %v1157
    %1796 = vmatprep.subr.mxu0 0.0
    %1797 = vmatpush2.msra.mxu0 %v1156
    %1798 = vmatprep.subr.mxu0 0.0
    %1799 = vmatpush2.msra.mxu0 %v1155
    %1800 = vmatprep.subr.mxu0 0.0
    %1801 = vmatpush2.msra.mxu0 %v1154
    %1802 = vmatprep.subr.mxu0 0.0
    %1803 = vmatpush2.msra.mxu0 %v1153
    %1804 = vmatprep.subr.mxu0 0.0
    %1805 = vmatpush2.msra.mxu0 %v1152
    %1806 = vmatprep.subr.mxu0 0.0
    %1807 = vmatpush2.msra.mxu0 %v1151
    %1808 = vmatprep.subr.mxu0 0.0
    %1809 = vmatpush2.msra.mxu0 %v1150
    %1810 = vmatprep.subr.mxu0 0.0
    %1811 = vmatpush2.msra.mxu0 %v1149
    %1812 = vmatprep.subr.mxu0 0.0
    %1813 = vmatpush2.msra.mxu0 %v1148
    %1814 = vmatprep.subr.mxu0 0.0
    %1815 = vmatpush2.msra.mxu0 %v1147
    %1816 = vmatprep.subr.mxu0 0.0
    %1817 = vmatpush2.msra.mxu0 %v1146
    %1818 = vmatprep.subr.mxu0 0.0
    %1819 = vmatpush2.msra.mxu0 %v1145
    %1820 = vmatprep.mubr.f32.mxu0 %v856
    %1821 = vmatmul.mubr.f32.gmra.mxu0 %v855
    %v1822 = vpop.f32.mrf.mxu0
    %v1823 = vadd.f32 %v1738, %v1822
    %v1824 = vpop.f32.mrf.mxu0
    %1825 = vmatprep.mubr.f32.mxu0 %v872
    %1826 = vmatmul.mubr.f32.gmra.mxu0 %v871
    %v1827 = vpop.f32.mrf.mxu0
    %v1828 = vadd.f32 %v1743, %v1827
    %v1829 = vpop.f32.mrf.mxu0
    %1830 = vmatprep.mubr.f32.mxu0 %v888
    %1831 = vmatmul.mubr.f32.gmra.mxu0 %v887
    %v1832 = vpop.f32.mrf.mxu0
    %v1833 = vadd.f32 %v1748, %v1832
    %v1834 = vpop.f32.mrf.mxu0
    %1835 = vmatprep.mubr.f32.mxu0 %v904
    %1836 = vmatmul.mubr.f32.gmra.mxu0 %v903
    %v1837 = vpop.f32.mrf.mxu0
    %v1838 = vadd.f32 %v1753, %v1837
    %v1839 = vpop.f32.mrf.mxu0
    %1840 = vdwg.mxu0
    %v1841 = vld [vmem:[%s4] sm:$0xff]
    %v1842 = vld [vmem:[%s4 + $0x8] sm:$0xff]
    %v1843 = vld [vmem:[%s4 + $0x10] sm:$0xff]
    %v1844 = vld [vmem:[%s4 + $0x18] sm:$0xff]
    %v1845 = vld [vmem:[%s5] sm:$0xff]
    %v1846 = vld [vmem:[%s5 + $0x8] sm:$0xff]
    %v1847 = vld [vmem:[%s5 + $0x10] sm:$0xff]
    %v1848 = vld [vmem:[%s5 + $0x18] sm:$0xff]
    %1850 = vset.pattern.permute.xlu0 0
    %1851 = vperm.xlu0 %1850, %v1845
    %v1852 = vpop.permute.xlu0 %1851
    %1855 = vset.pattern.permute.xlu0 0
    %1856 = vperm.xlu0 %1855, %v1846
    %v1857 = vpop.permute.xlu0 %1856
    %1860 = vset.pattern.permute.xlu0 0
    %1861 = vperm.xlu0 %1860, %v1847
    %v1862 = vpop.permute.xlu0 %1861
    %1865 = vset.pattern.permute.xlu0 0
    %1866 = vperm.xlu0 %1865, %v1848
    %v1867 = vpop.permute.xlu0 %1866
    %vm1869 = vcmask 261120
    %v1871 = vsel %vm1869, %v1841, 0
    %v1874 = vsel %vm1869, %v1842, 0
    %v1877 = vsel %vm1869, %v1843, 0
    %v1880 = vsel %vm1869, %v1844, 0
    %1882 = vmatprep.subr.mxu0 0.0
    %1883 = vmatpush1.msra.mxu0 0.0
    %1884 = vmatprep.subr.mxu0 0.0
    %1885 = vmatpush1.msra.mxu0 0.0
    %1886 = vmatprep.subr.mxu0 0.0
    %1887 = vmatpush1.msra.mxu0 0.0
    %1888 = vmatprep.subr.mxu0 0.0
    %1889 = vmatpush1.msra.mxu0 0.0
    %1890 = vmatprep.subr.mxu0 0.0
    %1891 = vmatpush1.msra.mxu0 0.0
    %1892 = vmatprep.subr.mxu0 0.0
    %1893 = vmatpush1.msra.mxu0 0.0
    %1894 = vmatprep.subr.mxu0 0.0
    %1895 = vmatpush1.msra.mxu0 0.0
    %1896 = vmatprep.subr.mxu0 0.0
    %1897 = vmatpush1.msra.mxu0 0.0
    %1898 = vmatprep.subr.mxu0 0.0
    %1899 = vmatpush1.msra.mxu0 0.0
    %1900 = vmatprep.subr.mxu0 0.0
    %1901 = vmatpush1.msra.mxu0 0.0
    %1902 = vmatprep.subr.mxu0 0.0
    %1903 = vmatpush1.msra.mxu0 0.0
    %1904 = vmatprep.subr.mxu0 0.0
    %1905 = vmatpush1.msra.mxu0 0.0
    %1906 = vmatprep.subr.mxu0 0.0
    %1907 = vmatpush1.msra.mxu0 %v1838
    %1908 = vmatprep.subr.mxu0 0.0
    %1909 = vmatpush1.msra.mxu0 %v1833
    %1910 = vmatprep.subr.mxu0 0.0
    %1911 = vmatpush1.msra.mxu0 %v1828
    %1912 = vmatprep.subr.mxu0 0.0
    %1913 = vmatpush1.msra.mxu0 %v1823
    %1914 = vmatprep.subr.mxu0 0.0
    %1915 = vmatpush2.msra.mxu0 0.0
    %1916 = vmatprep.subr.mxu0 0.0
    %1917 = vmatpush2.msra.mxu0 0.0
    %1918 = vmatprep.subr.mxu0 0.0
    %1919 = vmatpush2.msra.mxu0 0.0
    %1920 = vmatprep.subr.mxu0 0.0
    %1921 = vmatpush2.msra.mxu0 0.0
    %1922 = vmatprep.subr.mxu0 0.0
    %1923 = vmatpush2.msra.mxu0 0.0
    %1924 = vmatprep.subr.mxu0 0.0
    %1925 = vmatpush2.msra.mxu0 0.0
    %1926 = vmatprep.subr.mxu0 0.0
    %1927 = vmatpush2.msra.mxu0 0.0
    %1928 = vmatprep.subr.mxu0 0.0
    %1929 = vmatpush2.msra.mxu0 0.0
    %1930 = vmatprep.subr.mxu0 0.0
    %1931 = vmatpush2.msra.mxu0 0.0
    %1932 = vmatprep.subr.mxu0 0.0
    %1933 = vmatpush2.msra.mxu0 0.0
    %1934 = vmatprep.subr.mxu0 0.0
    %1935 = vmatpush2.msra.mxu0 0.0
    %1936 = vmatprep.subr.mxu0 0.0
    %1937 = vmatpush2.msra.mxu0 0.0
    %1938 = vmatprep.subr.mxu0 0.0
    %1939 = vmatpush2.msra.mxu0 0.0
    %1940 = vmatprep.subr.mxu0 0.0
    %1941 = vmatpush2.msra.mxu0 0.0
    %1942 = vmatprep.subr.mxu0 0.0
    %1943 = vmatpush2.msra.mxu0 0.0
    %1944 = vmatprep.subr.mxu0 0.0
    %1945 = vmatpush2.msra.mxu0 0.0
    %1946 = vmatprep.mubr.f32.mxu0 0.0
    %1947 = vmatmul.mubr.f32.gmra.mxu0 %v1871
    %v1948 = vpop.f32.mrf.mxu0
    %v1949 = vadd.f32 %v1852, %v1948
    %v1950 = vpop.f32.mrf.mxu0
    %1951 = vmatprep.mubr.f32.mxu0 0.0
    %1952 = vmatmul.mubr.f32.gmra.mxu0 %v1874
    %v1953 = vpop.f32.mrf.mxu0
    %v1954 = vadd.f32 %v1857, %v1953
    %v1955 = vpop.f32.mrf.mxu0
    %1956 = vmatprep.mubr.f32.mxu0 0.0
    %1957 = vmatmul.mubr.f32.gmra.mxu0 %v1877
    %v1958 = vpop.f32.mrf.mxu0
    %v1959 = vadd.f32 %v1862, %v1958
    %v1960 = vpop.f32.mrf.mxu0
    %1961 = vmatprep.mubr.f32.mxu0 0.0
    %1962 = vmatmul.mubr.f32.gmra.mxu0 %v1880
    %v1963 = vpop.f32.mrf.mxu0
    %v1964 = vadd.f32 %v1867, %v1963
    %v1965 = vpop.f32.mrf.mxu0
    %1966 = vdwg.mxu0
    %v1967 = vmul.f32 %v1949, %v1949
    %v1968 = vmul.f32 %v1954, %v1954
    %v1969 = vmul.f32 %v1959, %v1959
    %v1970 = vmul.f32 %v1964, %v1964
    %v1971 = vmul.f32 %v1949, %v1967
    %v1972 = vmul.f32 %v1954, %v1968
    %v1973 = vmul.f32 %v1959, %v1969
    %v1974 = vmul.f32 %v1964, %v1970
    %v1975 = vmul.f32 %v1971, 0.044715
    %v1976 = vmul.f32 %v1972, 0.044715
    %v1977 = vmul.f32 %v1973, 0.044715
    %v1978 = vmul.f32 %v1974, 0.044715
    %v1979 = vadd.f32 %v1949, %v1975
    %v1980 = vadd.f32 %v1954, %v1976
    %v1981 = vadd.f32 %v1959, %v1977
    %v1982 = vadd.f32 %v1964, %v1978
    %v1983 = vmul.f32 %v1979, 0.7978846
    %v1984 = vmul.f32 %v1980, 0.7978846
    %v1985 = vmul.f32 %v1981, 0.7978846
    %v1986 = vmul.f32 %v1982, 0.7978846
    %v1987 = vtanh.pop %v1983
    %v1988 = vtanh.pop %v1984
    %v1989 = vtanh.pop %v1985
    %v1990 = vtanh.pop %v1986
    %v1991 = vadd.f32 %v1987, 1.0
    %v1992 = vadd.f32 %v1988, 1.0
    %v1993 = vadd.f32 %v1989, 1.0
    %v1994 = vadd.f32 %v1990, 1.0
    %v1995 = vmul.f32 %v1991, 0.5
    %v1996 = vmul.f32 %v1992, 0.5
    %v1997 = vmul.f32 %v1993, 0.5
    %v1998 = vmul.f32 %v1994, 0.5
    %v1999 = vmul.f32 %v1949, %v1995
    %v2000 = vmul.f32 %v1954, %v1996
    %v2001 = vmul.f32 %v1959, %v1997
    %v2002 = vmul.f32 %v1964, %v1998
    %vm2003 = vcmask 64512
    %v2004 = vsel %vm2003, %v1999, 0.0
    %2005 = vadd.xlane.f32.xlu0 %v2004
    %v2006 = vpop.xlane.xlu0 %2005
    %v2007 = vsel %vm2003, %v2000, 0.0
    %2008 = vadd.xlane.f32.xlu0 %v2007
    %v2009 = vpop.xlane.xlu0 %2008
    %v2010 = vsel %vm2003, %v2001, 0.0
    %2011 = vadd.xlane.f32.xlu0 %v2010
    %v2012 = vpop.xlane.xlu0 %2011
    %v2013 = vsel %vm2003, %v2002, 0.0
    %2014 = vadd.xlane.f32.xlu0 %v2013
    %v2015 = vpop.xlane.xlu0 %2014
    %v2016 = vrcp.pop 8.0
    %v2017 = vmul.f32 %v2006, %v2016
    %v2018 = vmul.f32 %v2009, %v2016
    %v2019 = vmul.f32 %v2012, %v2016
    %v2020 = vmul.f32 %v2015, %v2016
    %v2021 = vld [vmem:[%s6] sm:$0xff]
    %v2022 = vld [vmem:[%s6 + $0x8] sm:$0xff]
    %v2023 = vld [vmem:[%s6 + $0x10] sm:$0xff]
    %v2024 = vld [vmem:[%s6 + $0x18] sm:$0xff]
    %v2025 = vmul.f32 %v2017, %v2021
    %v2026 = vmul.f32 %v2018, %v2022
    %v2027 = vmul.f32 %v2019, %v2023
    %v2028 = vmul.f32 %v2020, %v2024
    %vm2029 = vcmask 7168
    %v2030 = vsel %vm2029, %v2025, 0.0
    %v2031 = vsel %vm2029, %v2026, 0.0
    %v2032 = vadd.f32 %v2030, %v2031
    %v2033 = vsel %vm2029, %v2027, 0.0
    %v2034 = vadd.f32 %v2032, %v2033
    %v2035 = vsel %vm2029, %v2028, 0.0
    %v2036 = vadd.f32 %v2034, %v2035
    %v2037 = vrot.slane %v2036, 4
    %v2038 = vadd.f32 %v2036, %v2037
    %v2039 = vrot.slane %v2038, 2
    %v2040 = vadd.f32 %v2038, %v2039
    %v2041 = vrot.slane %v2040, 1
    %v2042 = vadd.f32 %v2040, %v2041
    %s2043 = sld [smem:[#allocation2]]
    %v2044 = vstv %s2043
    %v2045 = vadd.f32 %v2042, %v2044
    %vm2046 = vcmask 0
    %2047 = vst.msk [vmem:[#allocation3] sm:$0x1] %vm2046, %v2045
    // Predicated region
    $region34: #{tpu_custom_call.1} parent=1 // pred_check
      _
    $region35: #{tpu_custom_call.1} parent=1 // pred_check_branch
      %2049 = sbr.rel (0) target = $region37
    $region36: #{tpu_custom_call.1} parent=1 // pred_region
      %s2051 = ssub.s32 16, 16
      %2052 = vsyncadd [#allocation4], %s2051
      %s2054 = sshll.u32 [#allocation3], 4
      %s2055 = int_to_ptr.vmem [resolvable:$true] %s2054
      %2057 = dma.vmem_to_hbm [thread:$0]  %s2055, 16, %s8, [#allocation4]
    $region37: #{tpu_custom_call.1} parent=1 // pred_fallthru
      _
    // Predicated region
    $region38: #{tpu_custom_call.1} parent=1 // pred_check
      _
    $region39: #{tpu_custom_call.1} parent=1 // pred_check_branch
      %2059 = sbr.rel (0) target = $region41
    $region40: #{tpu_custom_call.1} parent=1 // pred_region
      %2060 = dma.done [#allocation4], 16
    $region41: #{tpu_custom_call.1} parent=1 // pred_fallthru
      _
    %2061 = vsyncpa [#allocation4], 1

</llo_original>
